<compile_context>
chip_gen: v5e
topology: v5e:2x2
jax: 0.10.0
libtpu: 0.0.40
codegen_flags: <defaults>
</compile_context>

<pallas_src>
import functools

import jax
import jax.numpy as jnp
from jax.experimental import pallas as pl
from jax.experimental.pallas import tpu as pltpu

L = 512   # self.L
D = 128   # self.D
K = 1     # self.K

STATS_W = 128          # lane width used to pack the (m, l) scalars per split
NEG_BIG = -1e30        # finite "-inf" for masking padded instances


def dattention_kernel(n_ref,                                   # (1,) int32 scalar prefetch: true N
                      x_ref, w1_ref, b1_ref, wa_ref, ba_ref,   # inputs
                      wv_ref, bv_ref,
                      araw_ref, stats_ref, acc_out_ref,        # outputs
                      m_sc, l_sc, acc_sc):                     # scratch (carry, per split/core)
    c = pl.program_id(0)            # split index ("parallel": one per TC on v7x)
    j = pl.program_id(1)            # tile index within this split ("arbitrary")
    steps = pl.num_programs(1)
    tn = araw_ref.shape[-1]

    @pl.when(j == 0)
    def _init():
        m_sc[...] = jnp.full_like(m_sc, NEG_BIG)
        l_sc[...] = jnp.zeros_like(l_sc)
        acc_sc[...] = jnp.zeros_like(acc_sc)

    # ---- self.feature: Linear(in_dim, 512) -> ReLU (dropout: identity) ----
    # bf16 MXU operands, f32 accumulation; single bf16 materialization of feat.
    feat = jnp.dot(x_ref[...], w1_ref[...], preferred_element_type=jnp.float32)
    feat = jnp.maximum(feat + b1_ref[...], 0.0).astype(jnp.bfloat16)     # (TN, 512) bf16

    # ---- self.attention: Linear(512,128) -> Tanh -> Linear(128,1) ----
    h = jnp.tanh(jnp.dot(feat, wa_ref[...], preferred_element_type=jnp.float32)
                 + ba_ref[...]).astype(jnp.bfloat16)                     # (TN, 128) bf16

    # scores lane-dense (1, TN): contract the D axis of wv (1,D) against the D
    # axis of h (TN,D) directly -- no explicit h.T materialization.
    scores = jax.lax.dot_general(
        wv_ref[...], h, (((1,), (1,)), ((), ())),
        preferred_element_type=jnp.float32) + bv_ref[0, 0]               # (1, TN)

    # mask instances beyond the true bag size N (trailing, zero-filled padding)
    col = (c * steps + j) * tn + jax.lax.broadcasted_iota(jnp.int32, (1, tn), 1)
    scores = jnp.where(col < n_ref[0], scores, NEG_BIG)

    # A_raw (pre-softmax attention), already in (1, N) orientation
    araw_ref[...] = scores

    # ---- online softmax over this split's instances + running p@feat ----
    m_prev = m_sc[...]                                                   # (1, 1)
    m_new = jnp.maximum(m_prev, jnp.max(scores, axis=-1, keepdims=True))
    alpha = jnp.exp(m_prev - m_new)
    p = jnp.exp(scores - m_new)                                          # (1, TN) f32
    l_sc[...] = alpha * l_sc[...] + jnp.sum(p, axis=-1, keepdims=True)
    acc_sc[...] = alpha * acc_sc[...] + jnp.dot(
        p.astype(jnp.bfloat16), feat, preferred_element_type=jnp.float32)
    m_sc[...] = m_new

    # ---- emit this split's raw partials; merge/classifier happen in XLA ----
    @pl.when(j == steps - 1)
    def _finalize():
        stats_ref[:, :STATS_W] = jnp.broadcast_to(m_sc[...], (1, STATS_W))
        stats_ref[:, STATS_W:] = jnp.broadcast_to(l_sc[...], (1, STATS_W))
        acc_out_ref[...] = acc_sc[...]


def _round_up(v, m):
    return ((v + m - 1) // m) * m


def prepare_x(x, *, tile_n=512, num_splits=2):
    """One-time (outside the hot per-call path) bf16 cast + zero padding of the bag.

    Pads in_dim to a multiple of 128 and N to a multiple of tile_n*num_splits.
    Padded rows/columns are zero, so feat stays finite in-kernel; padded
    instances are additionally masked on the attention scores.
    """
    N, in_dim = x.shape
    inp = _round_up(max(in_dim, 128), 128)
    n_pad = _round_up(max(N, 1), tile_n * num_splits)
    return jnp.zeros((n_pad, inp), jnp.bfloat16).at[:N, :in_dim].set(
        x.astype(jnp.bfloat16))


@functools.partial(jax.jit, static_argnames=("n_true", "in_dim", "tile_n", "num_splits"))
def dattention_forward(x_p, params, *, n_true, in_dim, tile_n=512, num_splits=2):
    """Fused ABMIL forward.  x_p is the pre-padded bf16 bag from prepare_x()."""
    assert tile_n % 128 == 0, "tile_n must be a multiple of 128 (lane-dense A_raw blocks)"
    n_pad, inp = x_p.shape
    assert n_pad % (tile_n * num_splits) == 0
    steps = n_pad // (tile_n * num_splits)
    C = params["wc"].shape[1]

    # Weights: bf16 MXU operands (small; padded/cast per call is negligible),
    # biases stay f32.  All weights use constant-index BlockSpecs -> resident.
    w1 = jnp.zeros((inp, L), jnp.bfloat16).at[:in_dim, :].set(
        params["w1"].astype(jnp.bfloat16))
    b1 = params["b1"].astype(jnp.float32).reshape(1, L)
    wa = params["wa"].astype(jnp.bfloat16)
    ba = params["ba"].astype(jnp.float32).reshape(1, D)
    wv = params["wv"].astype(jnp.bfloat16).reshape(1, D)
    bv = params["bv"].astype(jnp.float32).reshape(1, 1)
    n_arr = jnp.array([n_true], jnp.int32)      # scalar-prefetch: true bag size

    const = lambda c, j, n: (0, 0)

    grid_spec = pltpu.PrefetchScalarGridSpec(
        num_scalar_prefetch=1,
        grid=(num_splits, steps),
        in_specs=[
            pl.BlockSpec((tile_n, inp), lambda c, j, n: (c * steps + j, 0)),  # x (streams)
            pl.BlockSpec((inp, L), const),                       # w1 (resident)
            pl.BlockSpec((1, L), const),                         # b1
            pl.BlockSpec((L, D), const),                         # wa
            pl.BlockSpec((1, D), const),                         # ba
            pl.BlockSpec((1, D), const),                         # wv (Linear(D,1).weight)
            pl.BlockSpec(memory_space=pltpu.MemorySpace.SMEM),   # bv scalar in SMEM
        ],
        out_specs=[
            pl.BlockSpec((1, tile_n), lambda c, j, n: (0, c * steps + j)),  # A_raw
            pl.BlockSpec((1, 2 * STATS_W), lambda c, j, n: (0, c)),         # (m, l) partials
            pl.BlockSpec((1, L), lambda c, j, n: (0, c)),                   # acc partials
        ],
        scratch_shapes=[
            pltpu.VMEM((1, 1), jnp.float32),     # running max
            pltpu.VMEM((1, 1), jnp.float32),     # running softmax denom
            pltpu.VMEM((1, L), jnp.float32),     # running weighted feature sum
        ],
    )

    a_raw_pad, stats, acc_part = pl.pallas_call(
        dattention_kernel,
        grid_spec=grid_spec,
        out_shape=(
            jax.ShapeDtypeStruct((1, n_pad), jnp.float32),                 # A_raw (lane-dense)
            jax.ShapeDtypeStruct((1, num_splits * 2 * STATS_W), jnp.float32),
            jax.ShapeDtypeStruct((1, num_splits * L), jnp.float32),
        ),
        compiler_params=pltpu.CompilerParams(
            # leading split axis parallel (uses both v7x TCs), instance axis carries
            dimension_semantics=("parallel", "arbitrary"),
            # fits v7x's 64 MiB physical VMEM with headroom; usage at default
            # tile_n=512 is only a few MiB (x dbuf + bf16 feat + resident weights)
            vmem_limit_bytes=48 * 1024 * 1024,
        ),
    )(n_arr, x_p, w1, b1, wa, ba, wv, bv)

    # ---- merge split partials (exact f32, off the hot path) ----
    stats = stats.reshape(num_splits, 2, STATS_W)
    m_part = stats[:, 0, :1]                                   # (S, 1)
    l_part = stats[:, 1, :1]                                   # (S, 1)
    acc_part = acc_part.reshape(num_splits, L)                 # (S, L)
    m_max = jnp.max(m_part, axis=0, keepdims=True)             # (1, 1)
    scale = jnp.exp(m_part - m_max)                            # (S, 1); 0 for all-padded splits
    denom = jnp.sum(l_part * scale)                            # scalar
    M = jnp.sum(acc_part * scale, axis=0, keepdims=True) / denom   # (1, 512)

    # ---- classifier + softmax over classes (tiny; exact f32) ----
    wc = params["wc"].astype(jnp.float32)
    bc = params["bc"].astype(jnp.float32).reshape(1, C)
    logits = M @ wc + bc
    y_prob = jax.nn.softmax(logits, axis=1)
    y_hat = jnp.argmax(logits, axis=1, keepdims=True)          # torch.topk(logits,1,dim=1)[1]
    A_raw = a_raw_pad[:, :n_true]                              # drop padded instances
    return logits, y_prob, y_hat, A_raw, {}


def init_params(key, in_dim, n_classes):
    ks = jax.random.split(key, 8)
    s = 0.05
    return {
        "w1": jax.random.normal(ks[0], (in_dim, L), jnp.float32) * s,
        "b1": jax.random.normal(ks[1], (1, L), jnp.float32) * s,
        "wa": jax.random.normal(ks[2], (L, D), jnp.float32) * s,
        "ba": jax.random.normal(ks[3], (1, D), jnp.float32) * s,
        "wv": jax.random.normal(ks[4], (1, D), jnp.float32) * s,   # Linear(D, K=1).weight
        "bv": jax.random.normal(ks[5], (1, 1), jnp.float32) * s,
        "wc": jax.random.normal(ks[6], (L, n_classes), jnp.float32) * s,
        "bc": jax.random.normal(ks[7], (1, n_classes), jnp.float32) * s,
    }


def dattention_ref(x, p):
    """Pure f32 JAX reference mirroring the PyTorch forward."""
    feat = jnp.maximum(x @ p["w1"] + p["b1"], 0.0)
    h = jnp.tanh(feat @ p["wa"] + p["ba"])
    scores = jnp.sum(h * p["wv"], axis=-1, keepdims=True) + p["bv"]
    A_raw = scores.T
    A = jax.nn.softmax(A_raw, axis=-1)
    M = A @ feat
    logits = M @ p["wc"] + p["bc"]
    return logits, jax.nn.softmax(logits, axis=1), A_raw


if __name__ == "__main__":
    # Small but non-trivial bag: exercises the 2-way split grid (2 x 2 tiles of
    # 128), a split whose last tile is partially padded (300 -> 512 rows) and
    # in_dim padding (96 -> 128).
    N, in_dim, n_classes = 300, 96, 2
    tile_n, num_splits = 128, 2

    key = jax.random.PRNGKey(0)
    kx, kp = jax.random.split(key)
    x = jax.random.normal(kx, (N, in_dim), jnp.float32)
    params = init_params(kp, in_dim, n_classes)

    x_p = prepare_x(x, tile_n=tile_n, num_splits=num_splits)   # one-time pad + bf16 cast
    logits, y_prob, y_hat, a_raw, extra = dattention_forward(
        x_p, params, n_true=N, in_dim=in_dim, tile_n=tile_n, num_splits=num_splits)
    jax.block_until_ready((logits, y_prob, y_hat, a_raw))

    # correctness check against the pure-JAX f32 reference (kernel uses bf16 MXU operands)
    ref_logits, ref_prob, ref_araw = dattention_ref(x, params)
    assert logits.shape == (1, n_classes)
    assert y_prob.shape == (1, n_classes)
    assert y_hat.shape == (1, 1)
    assert a_raw.shape == (1, N)
    assert jnp.allclose(logits, ref_logits, rtol=2e-2, atol=2e-2)
    assert jnp.allclose(y_prob, ref_prob, rtol=2e-2, atol=2e-2)
    assert jnp.allclose(a_raw, ref_araw, rtol=2e-2, atol=2e-2)

    print("KERNEL_OK")
</pallas_src>

<mosaic_0001>
module attributes {stable_mosaic.version = 11 : i64} {
  func.func @dattention_kernel(%arg0: i32, %arg1: i32, %arg2: memref<1xi32, #tpu.memory_space<smem>>, %arg3: memref<128x128xbf16, #tpu.memory_space<vmem>>, %arg4: memref<128x512xbf16, #tpu.memory_space<vmem>>, %arg5: memref<1x512xf32, #tpu.memory_space<vmem>>, %arg6: memref<512x128xbf16, #tpu.memory_space<vmem>>, %arg7: memref<1x128xf32, #tpu.memory_space<vmem>>, %arg8: memref<1x128xbf16, #tpu.memory_space<vmem>>, %arg9: memref<1x1xf32, #tpu.memory_space<smem>>, %arg10: memref<1x128xf32, #tpu.memory_space<vmem>>, %arg11: memref<1x256xf32, #tpu.memory_space<vmem>>, %arg12: memref<1x512xf32, #tpu.memory_space<vmem>>, %arg13: memref<1x1xf32, #tpu.memory_space<vmem>>, %arg14: memref<1x1xf32, #tpu.memory_space<vmem>>, %arg15: memref<1x512xf32, #tpu.memory_space<vmem>>) attributes {dimension_semantics = [#tpu.dimension_semantics<parallel>, #tpu.dimension_semantics<arbitrary>], iteration_bounds = array<i64: 2, 2>, scalar_prefetch = 1 : i64, scratch_operands = 3 : i64, tpu.core_type = #tpu.core_type<tc>, window_params = [{transform_indices = @transform_0, window_bounds = array<i64: 128, 128>}, {pipeline_mode = #tpu.pipeline_mode<synchronous>, transform_indices = @transform_1, window_bounds = array<i64: 128, 512>}, {pipeline_mode = #tpu.pipeline_mode<synchronous>, transform_indices = @transform_2, window_bounds = array<i64: 1, 512>}, {pipeline_mode = #tpu.pipeline_mode<synchronous>, transform_indices = @transform_3, window_bounds = array<i64: 512, 128>}, {pipeline_mode = #tpu.pipeline_mode<synchronous>, transform_indices = @transform_4, window_bounds = array<i64: 1, 128>}, {pipeline_mode = #tpu.pipeline_mode<synchronous>, transform_indices = @transform_5, window_bounds = array<i64: 1, 128>}, {transform_indices = @transform_6, window_bounds = array<i64: 1, 1>}, {transform_indices = @transform_7, window_bounds = array<i64: 1, 128>}, {transform_indices = @transform_8, window_bounds = array<i64: 1, 256>}, {transform_indices = @transform_9, window_bounds = array<i64: 1, 512>}]} {
    %c0_i32 = arith.constant 0 : i32
    %0 = arith.cmpi eq, %arg1, %c0_i32 : i32
    %1 = arith.extui %0 : i1 to i32
    %c0_i32_0 = arith.constant 0 : i32
    %2 = arith.cmpi ne, %1, %c0_i32_0 : i32
    scf.if %2 {
      %cst_37 = arith.constant -1.000000e+30 : f32
      %62 = vector.broadcast %cst_37 : f32 to vector<1x1xf32>
      %c0_38 = arith.constant 0 : index
      %c0_39 = arith.constant 0 : index
      %63 = vector.load %arg13[%c0_38, %c0_39] : memref<1x1xf32, #tpu.memory_space<vmem>>, vector<1x1xf32>
      tpu.vector_store %arg13[%c0_38, %c0_39], %62 {strides = array<i32>} : memref<1x1xf32, #tpu.memory_space<vmem>>, vector<1x1xf32>,
      %cst_40 = arith.constant 0.000000e+00 : f32
      %64 = vector.broadcast %cst_40 : f32 to vector<1x1xf32>
      %c0_41 = arith.constant 0 : index
      %c0_42 = arith.constant 0 : index
      %65 = vector.load %arg14[%c0_41, %c0_42] : memref<1x1xf32, #tpu.memory_space<vmem>>, vector<1x1xf32>
      tpu.vector_store %arg14[%c0_41, %c0_42], %64 {strides = array<i32>} : memref<1x1xf32, #tpu.memory_space<vmem>>, vector<1x1xf32>,
      %cst_43 = arith.constant 0.000000e+00 : f32
      %66 = vector.broadcast %cst_43 : f32 to vector<1x512xf32>
      %c0_44 = arith.constant 0 : index
      %c0_45 = arith.constant 0 : index
      %67 = vector.load %arg15[%c0_44, %c0_45] : memref<1x512xf32, #tpu.memory_space<vmem>>, vector<1x512xf32>
      tpu.vector_store %arg15[%c0_44, %c0_45], %66 {strides = array<i32>} : memref<1x512xf32, #tpu.memory_space<vmem>>, vector<1x512xf32>,
    } else {
    }
    %c0 = arith.constant 0 : index
    %c0_1 = arith.constant 0 : index
    %3 = vector.load %arg3[%c0, %c0_1] : memref<128x128xbf16, #tpu.memory_space<vmem>>, vector<128x128xbf16>
    %c0_2 = arith.constant 0 : index
    %c0_3 = arith.constant 0 : index
    %4 = vector.load %arg4[%c0_2, %c0_3] : memref<128x512xbf16, #tpu.memory_space<vmem>>, vector<128x512xbf16>
    %cst = arith.constant dense<0.000000e+00> : vector<128x512xf32>
    %5 = tpu.matmul %3, %4, %cst {dimension_numbers = #tpu.dot_dimension_numbers<[1], [0], [0], [1], [0, 0, 1, 1], [], []>} : vector<128x128xbf16>, vector<128x512xbf16>, vector<128x512xf32> -> vector<128x512xf32>
    %c0_4 = arith.constant 0 : index
    %c0_5 = arith.constant 0 : index
    %6 = vector.load %arg5[%c0_4, %c0_5] : memref<1x512xf32, #tpu.memory_space<vmem>>, vector<1x512xf32>
    %7 = vector.broadcast %6 : vector<1x512xf32> to vector<128x512xf32>
    %8 = arith.addf %5, %7 : vector<128x512xf32>
    %cst_6 = arith.constant 0.000000e+00 : f32
    %9 = vector.broadcast %cst_6 : f32 to vector<128x512xf32>
    %10 = arith.maximumf %8, %9 : vector<128x512xf32>
    %11 = arith.truncf %10 : vector<128x512xf32> to vector<128x512xbf16>
    %c0_7 = arith.constant 0 : index
    %c0_8 = arith.constant 0 : index
    %12 = vector.load %arg6[%c0_7, %c0_8] : memref<512x128xbf16, #tpu.memory_space<vmem>>, vector<512x128xbf16>
    %cst_9 = arith.constant dense<0.000000e+00> : vector<128x128xf32>
    %13 = tpu.matmul %11, %12, %cst_9 {dimension_numbers = #tpu.dot_dimension_numbers<[1], [0], [0], [1], [0, 0, 1, 1], [], []>} : vector<128x512xbf16>, vector<512x128xbf16>, vector<128x128xf32> -> vector<128x128xf32>
    %c0_10 = arith.constant 0 : index
    %c0_11 = arith.constant 0 : index
    %14 = vector.load %arg7[%c0_10, %c0_11] : memref<1x128xf32, #tpu.memory_space<vmem>>, vector<1x128xf32>
    %15 = vector.broadcast %14 : vector<1x128xf32> to vector<128x128xf32>
    %16 = arith.addf %13, %15 : vector<128x128xf32>
    %17 = math.tanh %16 : vector<128x128xf32>
    %18 = arith.truncf %17 : vector<128x128xf32> to vector<128x128xbf16>
    %c0_12 = arith.constant 0 : index
    %c0_13 = arith.constant 0 : index
    %19 = vector.load %arg8[%c0_12, %c0_13] : memref<1x128xbf16, #tpu.memory_space<vmem>>, vector<1x128xbf16>
    %cst_14 = arith.constant dense<0.000000e+00> : vector<1x128xf32>
    %20 = tpu.matmul %19, %18, %cst_14 {dimension_numbers = #tpu.dot_dimension_numbers<[1], [1], [0], [0], [0, 0, 1, 0], [], []>} : vector<1x128xbf16>, vector<128x128xbf16>, vector<1x128xf32> -> vector<1x128xf32>
    %c0_15 = arith.constant 0 : index
    %c0_16 = arith.constant 0 : index
    %21 = memref.load %arg9[%c0_15, %c0_16] : memref<1x1xf32, #tpu.memory_space<smem>>
    %22 = vector.broadcast %21 : f32 to vector<1x128xf32>
    %23 = arith.addf %20, %22 : vector<1x128xf32>
    %c2_i32 = arith.constant 2 : i32
    %24 = arith.muli %arg0, %c2_i32 : i32
    %25 = arith.addi %24, %arg1 : i32
    %c128_i32 = arith.constant 128 : i32
    %26 = arith.muli %25, %c128_i32 : i32
    %27 = tpu.iota {dimensions = array<i32: 1>} : vector<1x128xi32>
    %28 = vector.broadcast %26 : i32 to vector<1x128xi32>
    %29 = arith.addi %28, %27 : vector<1x128xi32>
    %c0_17 = arith.constant 0 : index
    %30 = memref.load %arg2[%c0_17] : memref<1xi32, #tpu.memory_space<smem>>
    %31 = vector.broadcast %30 : i32 to vector<1x128xi32>
    %32 = arith.cmpi slt, %29, %31 : vector<1x128xi32>
    %cst_18 = arith.constant -1.000000e+30 : f32
    %33 = vector.broadcast %cst_18 : f32 to vector<1x128xf32>
    %34 = arith.select %32, %23, %33 : vector<1x128xi1>, vector<1x128xf32>
    %c0_19 = arith.constant 0 : index
    %c0_20 = arith.constant 0 : index
    %35 = vector.load %arg10[%c0_19, %c0_20] : memref<1x128xf32, #tpu.memory_space<vmem>>, vector<1x128xf32>
    tpu.vector_store %arg10[%c0_19, %c0_20], %34 {strides = array<i32>} : memref<1x128xf32, #tpu.memory_space<vmem>>, vector<1x128xf32>,
    %c0_21 = arith.constant 0 : index
    %c0_22 = arith.constant 0 : index
    %36 = vector.load %arg13[%c0_21, %c0_22] : memref<1x1xf32, #tpu.memory_space<vmem>>, vector<1x1xf32>
    %cst_23 = arith.constant dense<0xFF800000> : vector<1xf32>
    %37 = vector.multi_reduction <maximumf>, %34, %cst_23 [1] : vector<1x128xf32> to vector<1xf32>
    %38 = vector.shape_cast %37 : vector<1xf32> to vector<1x1xf32>
    %39 = arith.maximumf %36, %38 : vector<1x1xf32>
    %40 = arith.subf %36, %39 : vector<1x1xf32>
    %41 = math.exp %40 : vector<1x1xf32>
    %42 = vector.broadcast %39 : vector<1x1xf32> to vector<1x128xf32>
    %43 = arith.subf %34, %42 : vector<1x128xf32>
    %44 = math.exp %43 : vector<1x128xf32>
    %c0_24 = arith.constant 0 : index
    %c0_25 = arith.constant 0 : index
    %45 = vector.load %arg14[%c0_24, %c0_25] : memref<1x1xf32, #tpu.memory_space<vmem>>, vector<1x1xf32>
    %46 = arith.mulf %41, %45 : vector<1x1xf32>
    %cst_26 = arith.constant dense<0.000000e+00> : vector<1xf32>
    %47 = vector.multi_reduction <add>, %44, %cst_26 [1] : vector<1x128xf32> to vector<1xf32>
    %48 = vector.shape_cast %47 : vector<1xf32> to vector<1x1xf32>
    %49 = arith.addf %46, %48 : vector<1x1xf32>
    %c0_27 = arith.constant 0 : index
    %c0_28 = arith.constant 0 : index
    %50 = vector.load %arg14[%c0_27, %c0_28] : memref<1x1xf32, #tpu.memory_space<vmem>>, vector<1x1xf32>
    tpu.vector_store %arg14[%c0_27, %c0_28], %49 {strides = array<i32>} : memref<1x1xf32, #tpu.memory_space<vmem>>, vector<1x1xf32>,
    %c0_29 = arith.constant 0 : index
    %c0_30 = arith.constant 0 : index
    %51 = vector.load %arg15[%c0_29, %c0_30] : memref<1x512xf32, #tpu.memory_space<vmem>>, vector<1x512xf32>
    %52 = vector.broadcast %41 : vector<1x1xf32> to vector<1x512xf32>
    %53 = arith.mulf %52, %51 : vector<1x512xf32>
    %54 = arith.truncf %44 : vector<1x128xf32> to vector<1x128xbf16>
    %cst_31 = arith.constant dense<0.000000e+00> : vector<1x512xf32>
    %55 = tpu.matmul %54, %11, %cst_31 {dimension_numbers = #tpu.dot_dimension_numbers<[1], [0], [0], [1], [0, 0, 1, 1], [], []>} : vector<1x128xbf16>, vector<128x512xbf16>, vector<1x512xf32> -> vector<1x512xf32>
    %56 = arith.addf %53, %55 : vector<1x512xf32>
    %c0_32 = arith.constant 0 : index
    %c0_33 = arith.constant 0 : index
    %57 = vector.load %arg15[%c0_32, %c0_33] : memref<1x512xf32, #tpu.memory_space<vmem>>, vector<1x512xf32>
    tpu.vector_store %arg15[%c0_32, %c0_33], %56 {strides = array<i32>} : memref<1x512xf32, #tpu.memory_space<vmem>>, vector<1x512xf32>,
    %c0_34 = arith.constant 0 : index
    %c0_35 = arith.constant 0 : index
    %58 = vector.load %arg13[%c0_34, %c0_35] : memref<1x1xf32, #tpu.memory_space<vmem>>, vector<1x1xf32>
    tpu.vector_store %arg13[%c0_34, %c0_35], %39 {strides = array<i32>} : memref<1x1xf32, #tpu.memory_space<vmem>>, vector<1x1xf32>,
    %c1_i32 = arith.constant 1 : i32
    %59 = arith.cmpi eq, %arg1, %c1_i32 : i32
    %60 = arith.extui %59 : i1 to i32
    %c0_i32_36 = arith.constant 0 : i32
    %61 = arith.cmpi ne, %60, %c0_i32_36 : i32
    scf.if %61 {
      %c0_37 = arith.constant 0 : index
      %c0_38 = arith.constant 0 : index
      %62 = vector.load %arg13[%c0_37, %c0_38] : memref<1x1xf32, #tpu.memory_space<vmem>>, vector<1x1xf32>
      %63 = vector.shape_cast %62 : vector<1x1xf32> to vector<1x1xf32>
      %64 = vector.broadcast %63 : vector<1x1xf32> to vector<1x128xf32>
      %c0_39 = arith.constant 0 : index
      %c0_40 = arith.constant 0 : index
      %65 = vector.load %arg11[%c0_39, %c0_40] : memref<1x256xf32, #tpu.memory_space<vmem>>, vector<1x128xf32>
      tpu.vector_store %arg11[%c0_39, %c0_40], %64 {strides = array<i32>} : memref<1x256xf32, #tpu.memory_space<vmem>>, vector<1x128xf32>,
      %c0_41 = arith.constant 0 : index
      %c0_42 = arith.constant 0 : index
      %66 = vector.load %arg14[%c0_41, %c0_42] : memref<1x1xf32, #tpu.memory_space<vmem>>, vector<1x1xf32>
      %67 = vector.shape_cast %66 : vector<1x1xf32> to vector<1x1xf32>
      %68 = vector.broadcast %67 : vector<1x1xf32> to vector<1x128xf32>
      %c0_43 = arith.constant 0 : index
      %c128 = arith.constant 128 : index
      %69 = vector.load %arg11[%c0_43, %c128] : memref<1x256xf32, #tpu.memory_space<vmem>>, vector<1x128xf32>
      tpu.vector_store %arg11[%c0_43, %c128], %68 {strides = array<i32>} : memref<1x256xf32, #tpu.memory_space<vmem>>, vector<1x128xf32>,
      %c0_44 = arith.constant 0 : index
      %c0_45 = arith.constant 0 : index
      %70 = vector.load %arg15[%c0_44, %c0_45] : memref<1x512xf32, #tpu.memory_space<vmem>>, vector<1x512xf32>
      %c0_46 = arith.constant 0 : index
      %c0_47 = arith.constant 0 : index
      %71 = vector.load %arg12[%c0_46, %c0_47] : memref<1x512xf32, #tpu.memory_space<vmem>>, vector<1x512xf32>
      tpu.vector_store %arg12[%c0_46, %c0_47], %70 {strides = array<i32>} : memref<1x512xf32, #tpu.memory_space<vmem>>, vector<1x512xf32>,
    } else {
    }
    return
  }
  func.func @transform_0(%arg0: i32, %arg1: i32, %arg2: memref<1xi32, #tpu.memory_space<smem>>) -> (i32, i32) {
    %c2_i32 = arith.constant 2 : i32
    %0 = arith.muli %arg0, %c2_i32 : i32
    %1 = arith.addi %0, %arg1 : i32
    %c0_i32 = arith.constant 0 : i32
    %c0_i32_0 = arith.constant 0 : i32
    return %1, %c0_i32 : i32, i32
  }
  func.func @transform_1(%arg0: i32, %arg1: i32, %arg2: memref<1xi32, #tpu.memory_space<smem>>) -> (i32, i32) {
    %c0_i32 = arith.constant 0 : i32
    %c0_i32_0 = arith.constant 0 : i32
    %c0_i32_1 = arith.constant 0 : i32
    return %c0_i32, %c0_i32_0 : i32, i32
  }
  func.func @transform_2(%arg0: i32, %arg1: i32, %arg2: memref<1xi32, #tpu.memory_space<smem>>) -> (i32, i32) {
    %c0_i32 = arith.constant 0 : i32
    %c0_i32_0 = arith.constant 0 : i32
    %c0_i32_1 = arith.constant 0 : i32
    return %c0_i32, %c0_i32_0 : i32, i32
  }
  func.func @transform_3(%arg0: i32, %arg1: i32, %arg2: memref<1xi32, #tpu.memory_space<smem>>) -> (i32, i32) {
    %c0_i32 = arith.constant 0 : i32
    %c0_i32_0 = arith.constant 0 : i32
    %c0_i32_1 = arith.constant 0 : i32
    return %c0_i32, %c0_i32_0 : i32, i32
  }
  func.func @transform_4(%arg0: i32, %arg1: i32, %arg2: memref<1xi32, #tpu.memory_space<smem>>) -> (i32, i32) {
    %c0_i32 = arith.constant 0 : i32
    %c0_i32_0 = arith.constant 0 : i32
    %c0_i32_1 = arith.constant 0 : i32
    return %c0_i32, %c0_i32_0 : i32, i32
  }
  func.func @transform_5(%arg0: i32, %arg1: i32, %arg2: memref<1xi32, #tpu.memory_space<smem>>) -> (i32, i32) {
    %c0_i32 = arith.constant 0 : i32
    %c0_i32_0 = arith.constant 0 : i32
    %c0_i32_1 = arith.constant 0 : i32
    return %c0_i32, %c0_i32_0 : i32, i32
  }
  func.func @transform_6(%arg0: i32, %arg1: i32, %arg2: memref<1xi32, #tpu.memory_space<smem>>) -> (i32, i32) {
    %c0_i32 = arith.constant 0 : i32
    %c0_i32_0 = arith.constant 0 : i32
    %c0_i32_1 = arith.constant 0 : i32
    return %c0_i32, %c0_i32_0 : i32, i32
  }
  func.func @transform_7(%arg0: i32, %arg1: i32, %arg2: memref<1xi32, #tpu.memory_space<smem>>) -> (i32, i32) {
    %c2_i32 = arith.constant 2 : i32
    %0 = arith.muli %arg0, %c2_i32 : i32
    %1 = arith.addi %0, %arg1 : i32
    %c0_i32 = arith.constant 0 : i32
    %c0_i32_0 = arith.constant 0 : i32
    return %c0_i32, %1 : i32, i32
  }
  func.func @transform_8(%arg0: i32, %arg1: i32, %arg2: memref<1xi32, #tpu.memory_space<smem>>) -> (i32, i32) {
    %c0_i32 = arith.constant 0 : i32
    %c0_i32_0 = arith.constant 0 : i32
    return %c0_i32, %arg0 : i32, i32
  }
  func.func @transform_9(%arg0: i32, %arg1: i32, %arg2: memref<1xi32, #tpu.memory_space<smem>>) -> (i32, i32) {
    %c0_i32 = arith.constant 0 : i32
    %c0_i32_0 = arith.constant 0 : i32
    return %c0_i32, %arg0 : i32, i32
  }
}

</mosaic_0001>

<llo_original>
// kernel: dattention_forward.1
$region0: #{dattention_forward.1}
  #allocation0 [shape = 'u32[]', space=smem, size = 0x4, offset = 0x4, fixed_abs, tag = 'smem constant byte address 0x4 - core index']
  #allocation1 [shape = 'u32[72,128]{1,0:T(1,128)}', space=vmem, size = 0x9000, scoped, tag = 'internal scratch']
  #allocation2 [shape = 'f32[1,1]{1,0:T(1,128)}', space=vmem, size = 0x200, scoped, tag = 'scratch operand']
  #allocation3 [shape = 'f32[1,1]{1,0:T(1,128)}', space=vmem, size = 0x200, scoped, tag = 'scratch operand']
  #allocation4 [shape = 'f32[1,512]{1,0:T(1,128)}', space=vmem, size = 0x800, scoped, tag = 'scratch operand']
  #allocation5 [shape = 's32[1]{0}', space=sflag, size = 0x4, scoped, tag = 'scoped memory for dattention_forward.1']
  #allocation6 [shape = 's32[1]{0:T(128)S(6)}', space=smem, size = 0x200, scoped, tag = 'prefetched SMEM operand 0']
  #allocation7 [shape = 'f32[1,1]{1,0:T(1,128)S(6)}', space=smem, size = 0x200, scoped, tag = 'scoped memory for dattention_forward.1']
  %s0 = inlined_call_operand.<no memory space> [shape: s32[1], index: 0, kind: input, shape index: {}]
  %s1 = inlined_call_operand.vmem [shape: bf16[512,128], index: 1, kind: input, shape index: {}]
  %s2 = inlined_call_operand.vmem [shape: bf16[128,512], index: 2, kind: input, shape index: {}]
  %s3 = inlined_call_operand.vmem [shape: f32[1,512], index: 3, kind: input, shape index: {}]
  %s4 = inlined_call_operand.vmem [shape: bf16[512,128], index: 4, kind: input, shape index: {}]
  %s5 = inlined_call_operand.vmem [shape: f32[1,128], index: 5, kind: input, shape index: {}]
  %s6 = inlined_call_operand.vmem [shape: bf16[1,128], index: 6, kind: input, shape index: {}]
  %s7 = inlined_call_operand.<no memory space> [shape: f32[1,1], index: 7, kind: input, shape index: {}]
  %s8 = inlined_call_operand.vmem [shape: f32[1,512], index: 8, kind: output, shape index: {0}]
  %s9 = inlined_call_operand.vmem [shape: f32[1,512], index: 9, kind: output, shape index: {1}]
  %s10 = inlined_call_operand.vmem [shape: f32[1,1024], index: 10, kind: output, shape index: {2}]
  %11 = xla_tuple %s8, %s9, %s10
  %s12 = sld [smem:[#allocation0]]
  $region85: #{dattention_forward.1} parent=0
    _
  %s14 = ssub.s32 1, %s12
  %s15 = scalar_select 0, %s14, %s12
  %16 = sst [smem:[#allocation6]] %s0
  %17 = sst [smem:[#allocation7]] %s7
  loop: start=0, step=1, limit=6
  $region2: #{dattention_forward.1} parent=0 // loop_pre_header
    _
  $region3: #{dattention_forward.1} parent=0 // loop_header
    %s19 = sphi 0, %s23
    %p20 = scmp.ge.s32.totalorder %s19, 6
    %s26 = sphi 0, %s38
    %s27 = sphi 0, %s34
    %s28 = sphi 0, %s26
    %s29 = sphi 0, %s27
    %s30 = sphi 0, %s28
    %s31 = sphi 0, %s29
    %s45 = sphi 0, %s47
    %s48 = sphi 0, %s45
    %s49 = sphi 0, %s48
    %s65 = sphi 0, %s49
    %s69 = sphi 0, %s69
    %s71 = sphi 0, %s69
    %s72 = sphi 0, %s71
    %s86 = sphi 0, %s72
    %s90 = sphi 0, %s90
    %s92 = sphi 0, %s90
    %s93 = sphi 0, %s92
    %s107 = sphi 0, %s93
    %s111 = sphi 0, %s111
    %s113 = sphi 0, %s111
    %s114 = sphi 0, %s113
    %s128 = sphi 0, %s114
    %s132 = sphi 0, %s132
    %s134 = sphi 0, %s132
    %s135 = sphi 0, %s134
    %s149 = sphi 0, %s135
    %s153 = sphi 0, %s153
    %s155 = sphi 0, %s153
    %s156 = sphi 0, %s155
    %s170 = sphi 0, %s156
    %s174 = sphi 0, %s174
    %s176 = sphi 0, %s174
    %s177 = sphi 0, %s176
    %s191 = sphi 0, %s177
    %s201 = sphi 0, %s203
    %s204 = sphi 0, %s201
    %s205 = sphi 0, %s204
    %s221 = sphi 0, %s205
    %s227 = sphi 0, %s229
    %s230 = sphi 0, %s227
    %s231 = sphi 0, %s230
    %s247 = sphi 0, %s231
    %s253 = sphi 0, %s255
    %s256 = sphi 0, %s253
    %s257 = sphi 0, %s256
    %s273 = sphi 0, %s257
  $region4: #{dattention_forward.1} parent=0 // loop_header_branch
    %22 = sbr.rel (%p20) target = $region8
  $region5: #{dattention_forward.1} parent=0 // loop_body
    %s24 = ssub.s32 %s19, 1
    %s25 = ssub.s32 %s19, 2
    %s32 = sadd.s32 1, %s27
    %p33 = scmp.ge.s32.totalorder %s32, 2
    %s34 = scalar_select %p33, 0, %s32
    %s35 = sadd.s32 1, %s26
    %s36 = scalar_select %p33, %s35, %s26
    %p37 = scmp.ge.s32.totalorder %s36, 2
    %s38 = scalar_select %p37, 0, %s36
    %s39 = smul.u32 %s26, 2
    %s40 = sadd.s32 %s39, %s27
    %s41 = smul.u32 %s38, 2
    %s42 = sadd.s32 %s41, %s34
    %s43 = ssub.s32 %s40, %s42
    %p44 = scmp.eq.s32.totalorder %s43, 0
    %s46 = sadd.s32 %s45, 1
    %s47 = scalar_select %p44, %s45, %s46
    %p50 = pneg %p44
    %p51 = scmp.eq.s32.totalorder %s19, 3
    %p52 = por %p50, %p51
    %p53 = scmp.ne.s32.totalorder %s45, %s48
    %p54 = scmp.eq.s32.totalorder %s19, 0
    %p55 = por %p53, %p54
    %p56 = scmp.ne.s32.totalorder %s45, %s48
    %p57 = scmp.eq.s32.totalorder %s24, 3
    %p58 = por %p56, %p57
    %p59 = scmp.ne.s32.totalorder %s48, %s49
    %p60 = scmp.eq.s32.totalorder %s24, 0
    %p61 = por %p59, %p60
    %p62 = scmp.ne.s32.totalorder %s48, %s49
    %p63 = scmp.eq.s32.totalorder %s25, 3
    %p64 = por %p62, %p63
    %p66 = scmp.ne.s32.totalorder %s49, %s65
    %p67 = scmp.eq.s32.totalorder %s25, 0
    %p68 = por %p66, %p67
    %s70 = sadd.s32 %s69, 1
    %p73 = scmp.eq.s32.totalorder %s19, 3
    %p74 = scmp.ne.s32.totalorder %s69, %s71
    %p75 = scmp.eq.s32.totalorder %s19, 0
    %p76 = por %p74, %p75
    %p77 = scmp.ne.s32.totalorder %s69, %s71
    %p78 = scmp.eq.s32.totalorder %s24, 3
    %p79 = por %p77, %p78
    %p80 = scmp.ne.s32.totalorder %s71, %s72
    %p81 = scmp.eq.s32.totalorder %s24, 0
    %p82 = por %p80, %p81
    %p83 = scmp.ne.s32.totalorder %s71, %s72
    %p84 = scmp.eq.s32.totalorder %s25, 3
    %p85 = por %p83, %p84
    %p87 = scmp.ne.s32.totalorder %s72, %s86
    %p88 = scmp.eq.s32.totalorder %s25, 0
    %p89 = por %p87, %p88
    %s91 = sadd.s32 %s90, 1
    %p94 = scmp.eq.s32.totalorder %s19, 3
    %p95 = scmp.ne.s32.totalorder %s90, %s92
    %p96 = scmp.eq.s32.totalorder %s19, 0
    %p97 = por %p95, %p96
    %p98 = scmp.ne.s32.totalorder %s90, %s92
    %p99 = scmp.eq.s32.totalorder %s24, 3
    %p100 = por %p98, %p99
    %p101 = scmp.ne.s32.totalorder %s92, %s93
    %p102 = scmp.eq.s32.totalorder %s24, 0
    %p103 = por %p101, %p102
    %p104 = scmp.ne.s32.totalorder %s92, %s93
    %p105 = scmp.eq.s32.totalorder %s25, 3
    %p106 = por %p104, %p105
    %p108 = scmp.ne.s32.totalorder %s93, %s107
    %p109 = scmp.eq.s32.totalorder %s25, 0
    %p110 = por %p108, %p109
    %s112 = sadd.s32 %s111, 1
    %p115 = scmp.eq.s32.totalorder %s19, 3
    %p116 = scmp.ne.s32.totalorder %s111, %s113
    %p117 = scmp.eq.s32.totalorder %s19, 0
    %p118 = por %p116, %p117
    %p119 = scmp.ne.s32.totalorder %s111, %s113
    %p120 = scmp.eq.s32.totalorder %s24, 3
    %p121 = por %p119, %p120
    %p122 = scmp.ne.s32.totalorder %s113, %s114
    %p123 = scmp.eq.s32.totalorder %s24, 0
    %p124 = por %p122, %p123
    %p125 = scmp.ne.s32.totalorder %s113, %s114
    %p126 = scmp.eq.s32.totalorder %s25, 3
    %p127 = por %p125, %p126
    %p129 = scmp.ne.s32.totalorder %s114, %s128
    %p130 = scmp.eq.s32.totalorder %s25, 0
    %p131 = por %p129, %p130
    %s133 = sadd.s32 %s132, 1
    %p136 = scmp.eq.s32.totalorder %s19, 3
    %p137 = scmp.ne.s32.totalorder %s132, %s134
    %p138 = scmp.eq.s32.totalorder %s19, 0
    %p139 = por %p137, %p138
    %p140 = scmp.ne.s32.totalorder %s132, %s134
    %p141 = scmp.eq.s32.totalorder %s24, 3
    %p142 = por %p140, %p141
    %p143 = scmp.ne.s32.totalorder %s134, %s135
    %p144 = scmp.eq.s32.totalorder %s24, 0
    %p145 = por %p143, %p144
    %p146 = scmp.ne.s32.totalorder %s134, %s135
    %p147 = scmp.eq.s32.totalorder %s25, 3
    %p148 = por %p146, %p147
    %p150 = scmp.ne.s32.totalorder %s135, %s149
    %p151 = scmp.eq.s32.totalorder %s25, 0
    %p152 = por %p150, %p151
    %s154 = sadd.s32 %s153, 1
    %p157 = scmp.eq.s32.totalorder %s19, 3
    %p158 = scmp.ne.s32.totalorder %s153, %s155
    %p159 = scmp.eq.s32.totalorder %s19, 0
    %p160 = por %p158, %p159
    %p161 = scmp.ne.s32.totalorder %s153, %s155
    %p162 = scmp.eq.s32.totalorder %s24, 3
    %p163 = por %p161, %p162
    %p164 = scmp.ne.s32.totalorder %s155, %s156
    %p165 = scmp.eq.s32.totalorder %s24, 0
    %p166 = por %p164, %p165
    %p167 = scmp.ne.s32.totalorder %s155, %s156
    %p168 = scmp.eq.s32.totalorder %s25, 3
    %p169 = por %p167, %p168
    %p171 = scmp.ne.s32.totalorder %s156, %s170
    %p172 = scmp.eq.s32.totalorder %s25, 0
    %p173 = por %p171, %p172
    %s175 = sadd.s32 %s174, 1
    %p178 = scmp.eq.s32.totalorder %s19, 3
    %p179 = scmp.ne.s32.totalorder %s174, %s176
    %p180 = scmp.eq.s32.totalorder %s19, 0
    %p181 = por %p179, %p180
    %p182 = scmp.ne.s32.totalorder %s174, %s176
    %p183 = scmp.eq.s32.totalorder %s24, 3
    %p184 = por %p182, %p183
    %p185 = scmp.ne.s32.totalorder %s176, %s177
    %p186 = scmp.eq.s32.totalorder %s24, 0
    %p187 = por %p185, %p186
    %p188 = scmp.ne.s32.totalorder %s176, %s177
    %p189 = scmp.eq.s32.totalorder %s25, 3
    %p190 = por %p188, %p189
    %p192 = scmp.ne.s32.totalorder %s177, %s191
    %p193 = scmp.eq.s32.totalorder %s25, 0
    %p194 = por %p192, %p193
    %s195 = smul.u32 %s26, 2
    %s196 = sadd.s32 %s195, %s27
    %s197 = smul.u32 %s38, 2
    %s198 = sadd.s32 %s197, %s34
    %s199 = ssub.s32 %s196, %s198
    %p200 = scmp.eq.s32.totalorder %s199, 0
    %s202 = sadd.s32 %s201, 1
    %s203 = scalar_select %p200, %s201, %s202
    %p206 = pneg %p200
    %p207 = scmp.eq.s32.totalorder %s19, 3
    %p208 = por %p206, %p207
    %p209 = scmp.ne.s32.totalorder %s201, %s204
    %p210 = scmp.eq.s32.totalorder %s19, 0
    %p211 = por %p209, %p210
    %p212 = scmp.ne.s32.totalorder %s201, %s204
    %p213 = scmp.eq.s32.totalorder %s24, 3
    %p214 = por %p212, %p213
    %p215 = scmp.ne.s32.totalorder %s204, %s205
    %p216 = scmp.eq.s32.totalorder %s24, 0
    %p217 = por %p215, %p216
    %p218 = scmp.ne.s32.totalorder %s204, %s205
    %p219 = scmp.eq.s32.totalorder %s25, 3
    %p220 = por %p218, %p219
    %p222 = scmp.ne.s32.totalorder %s205, %s221
    %p223 = scmp.eq.s32.totalorder %s25, 0
    %p224 = por %p222, %p223
    %s225 = ssub.s32 %s26, %s38
    %p226 = scmp.eq.s32.totalorder %s225, 0
    %s228 = sadd.s32 %s227, 1
    %s229 = scalar_select %p226, %s227, %s228
    %p232 = pneg %p226
    %p233 = scmp.eq.s32.totalorder %s19, 3
    %p234 = por %p232, %p233
    %p235 = scmp.ne.s32.totalorder %s227, %s230
    %p236 = scmp.eq.s32.totalorder %s19, 0
    %p237 = por %p235, %p236
    %p238 = scmp.ne.s32.totalorder %s227, %s230
    %p239 = scmp.eq.s32.totalorder %s24, 3
    %p240 = por %p238, %p239
    %p241 = scmp.ne.s32.totalorder %s230, %s231
    %p242 = scmp.eq.s32.totalorder %s24, 0
    %p243 = por %p241, %p242
    %p244 = scmp.ne.s32.totalorder %s230, %s231
    %p245 = scmp.eq.s32.totalorder %s25, 3
    %p246 = por %p244, %p245
    %p248 = scmp.ne.s32.totalorder %s231, %s247
    %p249 = scmp.eq.s32.totalorder %s25, 0
    %p250 = por %p248, %p249
    %s251 = ssub.s32 %s26, %s38
    %p252 = scmp.eq.s32.totalorder %s251, 0
    %s254 = sadd.s32 %s253, 1
    %s255 = scalar_select %p252, %s253, %s254
    %p258 = pneg %p252
    %p259 = scmp.eq.s32.totalorder %s19, 3
    %p260 = por %p258, %p259
    %p261 = scmp.ne.s32.totalorder %s253, %s256
    %p262 = scmp.eq.s32.totalorder %s19, 0
    %p263 = por %p261, %p262
    %p264 = scmp.ne.s32.totalorder %s253, %s256
    %p265 = scmp.eq.s32.totalorder %s24, 3
    %p266 = por %p264, %p265
    %p267 = scmp.ne.s32.totalorder %s256, %s257
    %p268 = scmp.eq.s32.totalorder %s24, 0
    %p269 = por %p267, %p268
    %p270 = scmp.ne.s32.totalorder %s256, %s257
    %p271 = scmp.eq.s32.totalorder %s25, 3
    %p272 = por %p270, %p271
    %p274 = scmp.ne.s32.totalorder %s257, %s273
    %p275 = scmp.eq.s32.totalorder %s25, 0
    %p276 = por %p274, %p275
    %p277 = scmp.le.s32.totalorder 1, %s19
    %p278 = scmp.lt.s32.totalorder %s19, 5
    %p279 = pnand %p277, %p278
    %p280 = pneg %p279
    // Predicated region
    $region9: #{dattention_forward.1} parent=5 // pred_check
      _
    $region10: #{dattention_forward.1} parent=5 // pred_check_branch
      %282 = sbr.rel (%p279) target = $region12
    $region11: #{dattention_forward.1} parent=5 // pred_region
      %s283 = ssub.s32 %s19, 1
      // Predicated region
      $region13: #{dattention_forward.1} parent=11 // pred_check
        %p284 = pneg %p82
      $region14: #{dattention_forward.1} parent=11 // pred_check_branch
        %286 = sbr.rel (%p284) target = $region16
      $region15: #{dattention_forward.1} parent=11 // pred_region
        _
      $region16: #{dattention_forward.1} parent=11 // pred_fallthru
        _
      // Predicated region
      $region17: #{dattention_forward.1} parent=11 // pred_check
        %p287 = pneg %p103
      $region18: #{dattention_forward.1} parent=11 // pred_check_branch
        %289 = sbr.rel (%p287) target = $region20
      $region19: #{dattention_forward.1} parent=11 // pred_region
        _
      $region20: #{dattention_forward.1} parent=11 // pred_fallthru
        _
      // Predicated region
      $region21: #{dattention_forward.1} parent=11 // pred_check
        %p290 = pneg %p124
      $region22: #{dattention_forward.1} parent=11 // pred_check_branch
        %292 = sbr.rel (%p290) target = $region24
      $region23: #{dattention_forward.1} parent=11 // pred_region
        _
      $region24: #{dattention_forward.1} parent=11 // pred_fallthru
        _
      // Predicated region
      $region25: #{dattention_forward.1} parent=11 // pred_check
        %p293 = pneg %p145
      $region26: #{dattention_forward.1} parent=11 // pred_check_branch
        %295 = sbr.rel (%p293) target = $region28
      $region27: #{dattention_forward.1} parent=11 // pred_region
        _
      $region28: #{dattention_forward.1} parent=11 // pred_fallthru
        _
      // Predicated region
      $region29: #{dattention_forward.1} parent=11 // pred_check
        %p296 = pneg %p166
      $region30: #{dattention_forward.1} parent=11 // pred_check_branch
        %298 = sbr.rel (%p296) target = $region32
      $region31: #{dattention_forward.1} parent=11 // pred_region
        _
      $region32: #{dattention_forward.1} parent=11 // pred_fallthru
        _
      // Predicated region
      $region33: #{dattention_forward.1} parent=11 // pred_check
        %p299 = pneg %p187
      $region34: #{dattention_forward.1} parent=11 // pred_check_branch
        %301 = sbr.rel (%p299) target = $region36
      $region35: #{dattention_forward.1} parent=11 // pred_region
        _
      $region36: #{dattention_forward.1} parent=11 // pred_fallthru
        _
    $region12: #{dattention_forward.1} parent=5 // pred_fallthru
      _
    %p302 = scmp.lt.s32.totalorder %s19, 4
    // Predicated region
    $region37: #{dattention_forward.1} parent=5 // pred_check
      %p303 = pneg %p302
    $region38: #{dattention_forward.1} parent=5 // pred_check_branch
      %305 = sbr.rel (%p303) target = $region40
    $region39: #{dattention_forward.1} parent=5 // pred_region
      // Predicated region
      $region41: #{dattention_forward.1} parent=39 // pred_check
        %p306 = pneg %p55
      $region42: #{dattention_forward.1} parent=39 // pred_check_branch
        %308 = sbr.rel (%p306) target = $region44
      $region43: #{dattention_forward.1} parent=39 // pred_region
        %s309 = smul.u32 %s26, 2
        %s310 = sadd.s32 %s309, %s27
        %s311 = smul.u32 16, %s310
        %p312 = scmp.lt.s32.totalorder %s311, 63
        %s313 = scalar_select %p312, %s311, 63
        %s314 = smul.addr %s313, 4
        %s315 = scalar_lea.vmem %s1, %s314
        %s316 = smul.u32 %s26, 2
        %s317 = sadd.s32 %s316, %s27
        %s318 = smul.u32 16, %s317
      $region44: #{dattention_forward.1} parent=39 // pred_fallthru
        _
    $region40: #{dattention_forward.1} parent=5 // pred_fallthru
      _
    %p319 = scmp.le.s32.totalorder 1, %s19
    %p320 = scmp.lt.s32.totalorder %s19, 5
    %p321 = pnand %p319, %p320
    %p322 = pneg %p321
    // Predicated region
    $region45: #{dattention_forward.1} parent=5 // pred_check
      _
    $region46: #{dattention_forward.1} parent=5 // pred_check_branch
      %324 = sbr.rel (%p321) target = $region48
    $region47: #{dattention_forward.1} parent=5 // pred_region
      %s325 = ssub.s32 %s19, 1
      %s326 = smul.u32 %s28, 2
      %s327 = sadd.s32 %s326, %s29
      %s328 = smul.u32 16, %s327
      %p329 = scmp.lt.s32.totalorder %s328, 63
      %s330 = scalar_select %p329, %s328, 63
      %s331 = smul.addr %s330, 4
      %s332 = scalar_lea.vmem %s1, %s331
      %p333 = pneg %p61
      %p334 = pneg %p58
      %p335 = pneg %p82
      %p336 = pneg %p79
      %p337 = pneg %p103
      %p338 = pneg %p100
      %p339 = pneg %p124
      %p340 = pneg %p121
      %p341 = pneg %p145
      %p342 = pneg %p142
      %p343 = pneg %p166
      %p344 = pneg %p163
      %p345 = pneg %p187
      %p346 = pneg %p184
      %p347 = pneg %p217
      %p348 = pneg %p214
      %s349 = smul.u32 %s28, 2
      %s350 = sadd.s32 %s349, %s29
      %p351 = scmp.lt.s32.totalorder %s350, 3
      %s352 = scalar_select %p351, %s350, 3
      %s353 = scalar_lea.vmem %s8, %s352
      %p354 = pneg %p243
      %p355 = pneg %p240
      %s356 = smul.u32 2, %s28
      %p357 = scmp.lt.s32.totalorder %s356, 3
      %s358 = scalar_select %p357, %s356, 3
      %s359 = scalar_lea.vmem %s9, %s358
      %p360 = pneg %p269
      %p361 = pneg %p266
      %s362 = smul.u32 4, %s28
      %p363 = scmp.lt.s32.totalorder %s362, 7
      %s364 = scalar_select %p363, %s362, 7
      %s365 = scalar_lea.vmem %s10, %s364
      %s366 = smul.u32 %s28, 2
      %s367 = sadd.s32 %s366, %s29
      %s368 = smul.u32 16, %s367
      %p369 = scmp.lt.s32.totalorder %s368, 63
      %s370 = scalar_select %p369, %s368, 63
      %s371 = smul.addr %s370, 4
      %s372 = scalar_lea.vmem %s1, %s371
      %s373 = smul.u32 %s28, 2
      %s374 = sadd.s32 %s373, %s29
      %s375 = smul.u32 16, %s374
      %s376 = smul.u32 %s28, 2
      %s377 = sadd.s32 %s376, %s29
      %p378 = scmp.lt.s32.totalorder %s377, 3
      %s379 = scalar_select %p378, %s377, 3
      %s380 = scalar_lea.vmem %s8, %s379
      %s381 = smul.u32 %s28, 2
      %s382 = sadd.s32 %s381, %s29
      %s383 = smul.u32 2, %s28
      %p384 = scmp.lt.s32.totalorder %s383, 3
      %s385 = scalar_select %p384, %s383, 3
      %s386 = scalar_lea.vmem %s9, %s385
      %s387 = smul.u32 2, %s28
      %s388 = smul.u32 4, %s28
      %p389 = scmp.lt.s32.totalorder %s388, 7
      %s390 = scalar_select %p389, %s388, 7
      %s391 = scalar_lea.vmem %s10, %s390
      %s392 = smul.u32 4, %s28
      %p393 = scmp.eq.s32.totalorder %s29, 0
      // Predicated region
      $region49: #{dattention_forward.1} parent=47 // pred_check
        %p394 = pneg %p393
      $region50: #{dattention_forward.1} parent=47 // pred_check_branch
        %396 = sbr.rel (%p394) target = $region52
      $region51: #{dattention_forward.1} parent=47 // pred_region
        %vm397 = vcmask 0
        %398 = vst.msk [vmem:[#allocation2] sm:$0x1] %vm397, -1e+30
        %399 = vst.msk [vmem:[#allocation3] sm:$0x1] %vm397, 0.0
        %v400 = vlaneseq
        %vm401 = vcmp.ge.s32.totalorder %v400, 0
        %vm402 = vcmp.lt.s32.totalorder %v400, 512
        %vm403 = vmand %vm401, %vm402
        %404 = vst.msk [vmem:[#allocation4] sm:$0xf] %vm403, 0.0
      $region52: #{dattention_forward.1} parent=47 // pred_fallthru
        _
      %v405 = vld [vmem:[%s372] sm:$0xf]
      %v406 = vld [vmem:[%s372 + $0x4] sm:$0xf]
      %v407 = vld [vmem:[%s372 + $0x8] sm:$0xf]
      %v408 = vld [vmem:[%s372 + $0xc] sm:$0xf]
      %v409 = vld [vmem:[%s372 + $0x10] sm:$0xf]
      %v410 = vld [vmem:[%s372 + $0x14] sm:$0xf]
      %v411 = vld [vmem:[%s372 + $0x18] sm:$0xf]
      %v412 = vld [vmem:[%s372 + $0x1c] sm:$0xf]
      %v413 = vld [vmem:[%s372 + $0x20] sm:$0xf]
      %v414 = vld [vmem:[%s372 + $0x24] sm:$0xf]
      %v415 = vld [vmem:[%s372 + $0x28] sm:$0xf]
      %v416 = vld [vmem:[%s372 + $0x2c] sm:$0xf]
      %v417 = vld [vmem:[%s372 + $0x30] sm:$0xf]
      %v418 = vld [vmem:[%s372 + $0x34] sm:$0xf]
      %v419 = vld [vmem:[%s372 + $0x38] sm:$0xf]
      %v420 = vld [vmem:[%s372 + $0x3c] sm:$0xf]
      %v421 = vld [vmem:[%s2] sm:$0xff]
      %v422 = vld [vmem:[%s2 + $0x8] sm:$0xff]
      %v423 = vld [vmem:[%s2 + $0x10] sm:$0xff]
      %v424 = vld [vmem:[%s2 + $0x18] sm:$0xff]
      %v425 = vld [vmem:[%s2 + $0x20] sm:$0xff]
      %v426 = vld [vmem:[%s2 + $0x28] sm:$0xff]
      %v427 = vld [vmem:[%s2 + $0x30] sm:$0xff]
      %v428 = vld [vmem:[%s2 + $0x38] sm:$0xff]
      %v429 = vld [vmem:[%s2 + $0x40] sm:$0xff]
      %v430 = vld [vmem:[%s2 + $0x48] sm:$0xff]
      %v431 = vld [vmem:[%s2 + $0x50] sm:$0xff]
      %v432 = vld [vmem:[%s2 + $0x58] sm:$0xff]
      %v433 = vld [vmem:[%s2 + $0x60] sm:$0xff]
      %v434 = vld [vmem:[%s2 + $0x68] sm:$0xff]
      %v435 = vld [vmem:[%s2 + $0x70] sm:$0xff]
      %v436 = vld [vmem:[%s2 + $0x78] sm:$0xff]
      %v437 = vld [vmem:[%s2 + $0x80] sm:$0xff]
      %v438 = vld [vmem:[%s2 + $0x88] sm:$0xff]
      %v439 = vld [vmem:[%s2 + $0x90] sm:$0xff]
      %v440 = vld [vmem:[%s2 + $0x98] sm:$0xff]
      %v441 = vld [vmem:[%s2 + $0xa0] sm:$0xff]
      %v442 = vld [vmem:[%s2 + $0xa8] sm:$0xff]
      %v443 = vld [vmem:[%s2 + $0xb0] sm:$0xff]
      %v444 = vld [vmem:[%s2 + $0xb8] sm:$0xff]
      %v445 = vld [vmem:[%s2 + $0xc0] sm:$0xff]
      %v446 = vld [vmem:[%s2 + $0xc8] sm:$0xff]
      %v447 = vld [vmem:[%s2 + $0xd0] sm:$0xff]
      %v448 = vld [vmem:[%s2 + $0xd8] sm:$0xff]
      %v449 = vld [vmem:[%s2 + $0xe0] sm:$0xff]
      %v450 = vld [vmem:[%s2 + $0xe8] sm:$0xff]
      %v451 = vld [vmem:[%s2 + $0xf0] sm:$0xff]
      %v452 = vld [vmem:[%s2 + $0xf8] sm:$0xff]
      %v453 = vld [vmem:[%s3] sm:$0xf]
      %v455 = vperm.slane %v453, 0
      %v456 = vperm.slane %v453, 1
      %v457 = vperm.slane %v453, 2
      %v458 = vperm.slane %v453, 3
      %v479 = vunpack.c.l.b16 %v405
      %v480 = vunpack.c.l.b16 %v406
      %v481 = vunpack.c.l.b16 %v407
      %v482 = vunpack.c.l.b16 %v408
      %v483 = vunpack.c.l.b16 %v409
      %v484 = vunpack.c.l.b16 %v410
      %v485 = vunpack.c.l.b16 %v411
      %v486 = vunpack.c.l.b16 %v412
      %v487 = vunpack.c.l.b16 %v413
      %v488 = vunpack.c.l.b16 %v414
      %v489 = vunpack.c.l.b16 %v415
      %v490 = vunpack.c.l.b16 %v416
      %v491 = vunpack.c.l.b16 %v417
      %v492 = vunpack.c.l.b16 %v418
      %v493 = vunpack.c.l.b16 %v419
      %v494 = vunpack.c.l.b16 %v420
      %v495 = vpack.c.b16 %v480, %v479
      %v496 = vpack.c.b16 %v482, %v481
      %v497 = vpack.c.b16 %v484, %v483
      %v498 = vpack.c.b16 %v486, %v485
      %v499 = vpack.c.b16 %v488, %v487
      %v500 = vpack.c.b16 %v490, %v489
      %v501 = vpack.c.b16 %v492, %v491
      %v502 = vpack.c.b16 %v494, %v493
      %v543 = vunpack.c.l.b16 %v421
      %v544 = vunpack.c.h.b16 %v421
      %v545 = vunpack.c.l.b16 %v422
      %v546 = vunpack.c.h.b16 %v422
      %v547 = vunpack.c.l.b16 %v423
      %v548 = vunpack.c.h.b16 %v423
      %v549 = vunpack.c.l.b16 %v424
      %v550 = vunpack.c.h.b16 %v424
      %v551 = vunpack.c.l.b16 %v425
      %v552 = vunpack.c.h.b16 %v425
      %v553 = vunpack.c.l.b16 %v426
      %v554 = vunpack.c.h.b16 %v426
      %v555 = vunpack.c.l.b16 %v427
      %v556 = vunpack.c.h.b16 %v427
      %v557 = vunpack.c.l.b16 %v428
      %v558 = vunpack.c.h.b16 %v428
      %v559 = vunpack.c.l.b16 %v429
      %v560 = vunpack.c.h.b16 %v429
      %v561 = vunpack.c.l.b16 %v430
      %v562 = vunpack.c.h.b16 %v430
      %v563 = vunpack.c.l.b16 %v431
      %v564 = vunpack.c.h.b16 %v431
      %v565 = vunpack.c.l.b16 %v432
      %v566 = vunpack.c.h.b16 %v432
      %v567 = vunpack.c.l.b16 %v433
      %v568 = vunpack.c.h.b16 %v433
      %v569 = vunpack.c.l.b16 %v434
      %v570 = vunpack.c.h.b16 %v434
      %v571 = vunpack.c.l.b16 %v435
      %v572 = vunpack.c.h.b16 %v435
      %v573 = vunpack.c.l.b16 %v436
      %v574 = vunpack.c.h.b16 %v436
      %v575 = vunpack.c.l.b16 %v437
      %v576 = vunpack.c.h.b16 %v437
      %v577 = vunpack.c.l.b16 %v438
      %v578 = vunpack.c.h.b16 %v438
      %v579 = vunpack.c.l.b16 %v439
      %v580 = vunpack.c.h.b16 %v439
      %v581 = vunpack.c.l.b16 %v440
      %v582 = vunpack.c.h.b16 %v440
      %v583 = vunpack.c.l.b16 %v441
      %v584 = vunpack.c.h.b16 %v441
      %v585 = vunpack.c.l.b16 %v442
      %v586 = vunpack.c.h.b16 %v442
      %v587 = vunpack.c.l.b16 %v443
      %v588 = vunpack.c.h.b16 %v443
      %v589 = vunpack.c.l.b16 %v444
      %v590 = vunpack.c.h.b16 %v444
      %v591 = vunpack.c.l.b16 %v445
      %v592 = vunpack.c.h.b16 %v445
      %v593 = vunpack.c.l.b16 %v446
      %v594 = vunpack.c.h.b16 %v446
      %v595 = vunpack.c.l.b16 %v447
      %v596 = vunpack.c.h.b16 %v447
      %v597 = vunpack.c.l.b16 %v448
      %v598 = vunpack.c.h.b16 %v448
      %v599 = vunpack.c.l.b16 %v449
      %v600 = vunpack.c.h.b16 %v449
      %v601 = vunpack.c.l.b16 %v450
      %v602 = vunpack.c.h.b16 %v450
      %v603 = vunpack.c.l.b16 %v451
      %v604 = vunpack.c.h.b16 %v451
      %v605 = vunpack.c.l.b16 %v452
      %v606 = vunpack.c.h.b16 %v452
      %v607 = vpack.c.b16 %v547, %v543
      %v608 = vpack.c.b16 %v548, %v544
      %v609 = vpack.c.b16 %v549, %v545
      %v610 = vpack.c.b16 %v550, %v546
      %v611 = vpack.c.b16 %v555, %v551
      %v612 = vpack.c.b16 %v556, %v552
      %v613 = vpack.c.b16 %v557, %v553
      %v614 = vpack.c.b16 %v558, %v554
      %v615 = vpack.c.b16 %v563, %v559
      %v616 = vpack.c.b16 %v564, %v560
      %v617 = vpack.c.b16 %v565, %v561
      %v618 = vpack.c.b16 %v566, %v562
      %v619 = vpack.c.b16 %v571, %v567
      %v620 = vpack.c.b16 %v572, %v568
      %v621 = vpack.c.b16 %v573, %v569
      %v622 = vpack.c.b16 %v574, %v570
      %v623 = vpack.c.b16 %v579, %v575
      %v624 = vpack.c.b16 %v580, %v576
      %v625 = vpack.c.b16 %v581, %v577
      %v626 = vpack.c.b16 %v582, %v578
      %v627 = vpack.c.b16 %v587, %v583
      %v628 = vpack.c.b16 %v588, %v584
      %v629 = vpack.c.b16 %v589, %v585
      %v630 = vpack.c.b16 %v590, %v586
      %v631 = vpack.c.b16 %v595, %v591
      %v632 = vpack.c.b16 %v596, %v592
      %v633 = vpack.c.b16 %v597, %v593
      %v634 = vpack.c.b16 %v598, %v594
      %v635 = vpack.c.b16 %v603, %v599
      %v636 = vpack.c.b16 %v604, %v600
      %v637 = vpack.c.b16 %v605, %v601
      %v638 = vpack.c.b16 %v606, %v602
      %671 = vmatpush.bf16.msra.mxu0 %v635
      %672 = vmatpush.bf16.msra.mxu0 %v631
      %673 = vmatpush.bf16.msra.mxu0 %v627
      %674 = vmatpush.bf16.msra.mxu0 %v623
      %675 = vmatpush.bf16.msra.mxu0 %v619
      %676 = vmatpush.bf16.msra.mxu0 %v615
      %677 = vmatpush.bf16.msra.mxu0 %v611
      %678 = vmatpush.bf16.msra.mxu0 %v607
      %679 = vmatmul.bf16.gmra.mxu0 %v495
      %v680 = vpop.f32.mrf.mxu0
      %v681 = vadd.f32 %v455, %v680
      %v682 = vpop.f32.mrf.mxu0
      %v683 = vadd.f32 %v455, %v682
      %684 = vmatmul.bf16.gmra.mxu0 %v496
      %v685 = vpop.f32.mrf.mxu0
      %v686 = vadd.f32 %v455, %v685
      %v687 = vpop.f32.mrf.mxu0
      %v688 = vadd.f32 %v455, %v687
      %689 = vmatmul.bf16.gmra.mxu0 %v497
      %v690 = vpop.f32.mrf.mxu0
      %v691 = vadd.f32 %v455, %v690
      %v692 = vpop.f32.mrf.mxu0
      %v693 = vadd.f32 %v455, %v692
      %694 = vmatmul.bf16.gmra.mxu0 %v498
      %v695 = vpop.f32.mrf.mxu0
      %v696 = vadd.f32 %v455, %v695
      %v697 = vpop.f32.mrf.mxu0
      %v698 = vadd.f32 %v455, %v697
      %699 = vmatmul.bf16.gmra.mxu0 %v499
      %v700 = vpop.f32.mrf.mxu0
      %v701 = vadd.f32 %v455, %v700
      %v702 = vpop.f32.mrf.mxu0
      %v703 = vadd.f32 %v455, %v702
      %704 = vmatmul.bf16.gmra.mxu0 %v500
      %v705 = vpop.f32.mrf.mxu0
      %v706 = vadd.f32 %v455, %v705
      %v707 = vpop.f32.mrf.mxu0
      %v708 = vadd.f32 %v455, %v707
      %709 = vmatmul.bf16.gmra.mxu0 %v501
      %v710 = vpop.f32.mrf.mxu0
      %v711 = vadd.f32 %v455, %v710
      %v712 = vpop.f32.mrf.mxu0
      %v713 = vadd.f32 %v455, %v712
      %714 = vmatmul.bf16.gmra.mxu0 %v502
      %v715 = vpop.f32.mrf.mxu0
      %v716 = vadd.f32 %v455, %v715
      %v717 = vpop.f32.mrf.mxu0
      %v718 = vadd.f32 %v455, %v717
      %719 = vdwg.mxu0
      %720 = vmatpush.bf16.msra.mxu0 %v636
      %721 = vmatpush.bf16.msra.mxu0 %v632
      %722 = vmatpush.bf16.msra.mxu0 %v628
      %723 = vmatpush.bf16.msra.mxu0 %v624
      %724 = vmatpush.bf16.msra.mxu0 %v620
      %725 = vmatpush.bf16.msra.mxu0 %v616
      %726 = vmatpush.bf16.msra.mxu0 %v612
      %727 = vmatpush.bf16.msra.mxu0 %v608
      %728 = vmatmul.bf16.gmra.mxu0 %v495
      %v729 = vpop.f32.mrf.mxu0
      %v730 = vadd.f32 %v456, %v729
      %v731 = vpop.f32.mrf.mxu0
      %v732 = vadd.f32 %v456, %v731
      %733 = vmatmul.bf16.gmra.mxu0 %v496
      %v734 = vpop.f32.mrf.mxu0
      %v735 = vadd.f32 %v456, %v734
      %v736 = vpop.f32.mrf.mxu0
      %v737 = vadd.f32 %v456, %v736
      %738 = vmatmul.bf16.gmra.mxu0 %v497
      %v739 = vpop.f32.mrf.mxu0
      %v740 = vadd.f32 %v456, %v739
      %v741 = vpop.f32.mrf.mxu0
      %v742 = vadd.f32 %v456, %v741
      %743 = vmatmul.bf16.gmra.mxu0 %v498
      %v744 = vpop.f32.mrf.mxu0
      %v745 = vadd.f32 %v456, %v744
      %v746 = vpop.f32.mrf.mxu0
      %v747 = vadd.f32 %v456, %v746
      %748 = vmatmul.bf16.gmra.mxu0 %v499
      %v749 = vpop.f32.mrf.mxu0
      %v750 = vadd.f32 %v456, %v749
      %v751 = vpop.f32.mrf.mxu0
      %v752 = vadd.f32 %v456, %v751
      %753 = vmatmul.bf16.gmra.mxu0 %v500
      %v754 = vpop.f32.mrf.mxu0
      %v755 = vadd.f32 %v456, %v754
      %v756 = vpop.f32.mrf.mxu0
      %v757 = vadd.f32 %v456, %v756
      %758 = vmatmul.bf16.gmra.mxu0 %v501
      %v759 = vpop.f32.mrf.mxu0
      %v760 = vadd.f32 %v456, %v759
      %v761 = vpop.f32.mrf.mxu0
      %v762 = vadd.f32 %v456, %v761
      %763 = vmatmul.bf16.gmra.mxu0 %v502
      %v764 = vpop.f32.mrf.mxu0
      %v765 = vadd.f32 %v456, %v764
      %v766 = vpop.f32.mrf.mxu0
      %v767 = vadd.f32 %v456, %v766
      %768 = vdwg.mxu0
      %769 = vmatpush.bf16.msra.mxu0 %v637
      %770 = vmatpush.bf16.msra.mxu0 %v633
      %771 = vmatpush.bf16.msra.mxu0 %v629
      %772 = vmatpush.bf16.msra.mxu0 %v625
      %773 = vmatpush.bf16.msra.mxu0 %v621
      %774 = vmatpush.bf16.msra.mxu0 %v617
      %775 = vmatpush.bf16.msra.mxu0 %v613
      %776 = vmatpush.bf16.msra.mxu0 %v609
      %777 = vmatmul.bf16.gmra.mxu0 %v495
      %v778 = vpop.f32.mrf.mxu0
      %v779 = vadd.f32 %v457, %v778
      %v780 = vpop.f32.mrf.mxu0
      %v781 = vadd.f32 %v457, %v780
      %782 = vmatmul.bf16.gmra.mxu0 %v496
      %v783 = vpop.f32.mrf.mxu0
      %v784 = vadd.f32 %v457, %v783
      %v785 = vpop.f32.mrf.mxu0
      %v786 = vadd.f32 %v457, %v785
      %787 = vmatmul.bf16.gmra.mxu0 %v497
      %v788 = vpop.f32.mrf.mxu0
      %v789 = vadd.f32 %v457, %v788
      %v790 = vpop.f32.mrf.mxu0
      %v791 = vadd.f32 %v457, %v790
      %792 = vmatmul.bf16.gmra.mxu0 %v498
      %v793 = vpop.f32.mrf.mxu0
      %v794 = vadd.f32 %v457, %v793
      %v795 = vpop.f32.mrf.mxu0
      %v796 = vadd.f32 %v457, %v795
      %797 = vmatmul.bf16.gmra.mxu0 %v499
      %v798 = vpop.f32.mrf.mxu0
      %v799 = vadd.f32 %v457, %v798
      %v800 = vpop.f32.mrf.mxu0
      %v801 = vadd.f32 %v457, %v800
      %802 = vmatmul.bf16.gmra.mxu0 %v500
      %v803 = vpop.f32.mrf.mxu0
      %v804 = vadd.f32 %v457, %v803
      %v805 = vpop.f32.mrf.mxu0
      %v806 = vadd.f32 %v457, %v805
      %807 = vmatmul.bf16.gmra.mxu0 %v501
      %v808 = vpop.f32.mrf.mxu0
      %v809 = vadd.f32 %v457, %v808
      %v810 = vpop.f32.mrf.mxu0
      %v811 = vadd.f32 %v457, %v810
      %812 = vmatmul.bf16.gmra.mxu0 %v502
      %v813 = vpop.f32.mrf.mxu0
      %v814 = vadd.f32 %v457, %v813
      %v815 = vpop.f32.mrf.mxu0
      %v816 = vadd.f32 %v457, %v815
      %817 = vdwg.mxu0
      %818 = vmatpush.bf16.msra.mxu0 %v638
      %819 = vmatpush.bf16.msra.mxu0 %v634
      %820 = vmatpush.bf16.msra.mxu0 %v630
      %821 = vmatpush.bf16.msra.mxu0 %v626
      %822 = vmatpush.bf16.msra.mxu0 %v622
      %823 = vmatpush.bf16.msra.mxu0 %v618
      %824 = vmatpush.bf16.msra.mxu0 %v614
      %825 = vmatpush.bf16.msra.mxu0 %v610
      %826 = vmatmul.bf16.gmra.mxu0 %v495
      %v827 = vpop.f32.mrf.mxu0
      %v828 = vadd.f32 %v458, %v827
      %v829 = vpop.f32.mrf.mxu0
      %v830 = vadd.f32 %v458, %v829
      %831 = vmatmul.bf16.gmra.mxu0 %v496
      %v832 = vpop.f32.mrf.mxu0
      %v833 = vadd.f32 %v458, %v832
      %v834 = vpop.f32.mrf.mxu0
      %v835 = vadd.f32 %v458, %v834
      %836 = vmatmul.bf16.gmra.mxu0 %v497
      %v837 = vpop.f32.mrf.mxu0
      %v838 = vadd.f32 %v458, %v837
      %v839 = vpop.f32.mrf.mxu0
      %v840 = vadd.f32 %v458, %v839
      %841 = vmatmul.bf16.gmra.mxu0 %v498
      %v842 = vpop.f32.mrf.mxu0
      %v843 = vadd.f32 %v458, %v842
      %v844 = vpop.f32.mrf.mxu0
      %v845 = vadd.f32 %v458, %v844
      %846 = vmatmul.bf16.gmra.mxu0 %v499
      %v847 = vpop.f32.mrf.mxu0
      %v848 = vadd.f32 %v458, %v847
      %v849 = vpop.f32.mrf.mxu0
      %v850 = vadd.f32 %v458, %v849
      %851 = vmatmul.bf16.gmra.mxu0 %v500
      %v852 = vpop.f32.mrf.mxu0
      %v853 = vadd.f32 %v458, %v852
      %v854 = vpop.f32.mrf.mxu0
      %v855 = vadd.f32 %v458, %v854
      %856 = vmatmul.bf16.gmra.mxu0 %v501
      %v857 = vpop.f32.mrf.mxu0
      %v858 = vadd.f32 %v458, %v857
      %v859 = vpop.f32.mrf.mxu0
      %v860 = vadd.f32 %v458, %v859
      %861 = vmatmul.bf16.gmra.mxu0 %v502
      %v862 = vpop.f32.mrf.mxu0
      %v863 = vadd.f32 %v458, %v862
      %v864 = vpop.f32.mrf.mxu0
      %v865 = vadd.f32 %v458, %v864
      %866 = vdwg.mxu0
      %v867 = vmax.f32 %v681, 0.0
      %v868 = vmax.f32 %v730, 0.0
      %v869 = vmax.f32 %v779, 0.0
      %v870 = vmax.f32 %v828, 0.0
      %v871 = vmax.f32 %v683, 0.0
      %v872 = vmax.f32 %v732, 0.0
      %v873 = vmax.f32 %v781, 0.0
      %v874 = vmax.f32 %v830, 0.0
      %v875 = vmax.f32 %v686, 0.0
      %v876 = vmax.f32 %v735, 0.0
      %v877 = vmax.f32 %v784, 0.0
      %v878 = vmax.f32 %v833, 0.0
      %v879 = vmax.f32 %v688, 0.0
      %v880 = vmax.f32 %v737, 0.0
      %v881 = vmax.f32 %v786, 0.0
      %v882 = vmax.f32 %v835, 0.0
      %v883 = vmax.f32 %v691, 0.0
      %v884 = vmax.f32 %v740, 0.0
      %v885 = vmax.f32 %v789, 0.0
      %v886 = vmax.f32 %v838, 0.0
      %v887 = vmax.f32 %v693, 0.0
      %v888 = vmax.f32 %v742, 0.0
      %v889 = vmax.f32 %v791, 0.0
      %v890 = vmax.f32 %v840, 0.0
      %v891 = vmax.f32 %v696, 0.0
      %v892 = vmax.f32 %v745, 0.0
      %v893 = vmax.f32 %v794, 0.0
      %v894 = vmax.f32 %v843, 0.0
      %v895 = vmax.f32 %v698, 0.0
      %v896 = vmax.f32 %v747, 0.0
      %v897 = vmax.f32 %v796, 0.0
      %v898 = vmax.f32 %v845, 0.0
      %v899 = vmax.f32 %v701, 0.0
      %v900 = vmax.f32 %v750, 0.0
      %v901 = vmax.f32 %v799, 0.0
      %v902 = vmax.f32 %v848, 0.0
      %v903 = vmax.f32 %v703, 0.0
      %v904 = vmax.f32 %v752, 0.0
      %v905 = vmax.f32 %v801, 0.0
      %v906 = vmax.f32 %v850, 0.0
      %v907 = vmax.f32 %v706, 0.0
      %v908 = vmax.f32 %v755, 0.0
      %v909 = vmax.f32 %v804, 0.0
      %v910 = vmax.f32 %v853, 0.0
      %v911 = vmax.f32 %v708, 0.0
      %v912 = vmax.f32 %v757, 0.0
      %v913 = vmax.f32 %v806, 0.0
      %v914 = vmax.f32 %v855, 0.0
      %v915 = vmax.f32 %v711, 0.0
      %v916 = vmax.f32 %v760, 0.0
      %v917 = vmax.f32 %v809, 0.0
      %v918 = vmax.f32 %v858, 0.0
      %v919 = vmax.f32 %v713, 0.0
      %v920 = vmax.f32 %v762, 0.0
      %v921 = vmax.f32 %v811, 0.0
      %v922 = vmax.f32 %v860, 0.0
      %v923 = vmax.f32 %v716, 0.0
      %v924 = vmax.f32 %v765, 0.0
      %v925 = vmax.f32 %v814, 0.0
      %v926 = vmax.f32 %v863, 0.0
      %v927 = vmax.f32 %v718, 0.0
      %v928 = vmax.f32 %v767, 0.0
      %v929 = vmax.f32 %v816, 0.0
      %v930 = vmax.f32 %v865, 0.0
      %v931 = vpack.c.bf16 %v871, %v867
      %v932 = vpack.c.bf16 %v872, %v868
      %v933 = vpack.c.bf16 %v873, %v869
      %v934 = vpack.c.bf16 %v874, %v870
      %v935 = vpack.c.bf16 %v879, %v875
      %v936 = vpack.c.bf16 %v880, %v876
      %v937 = vpack.c.bf16 %v881, %v877
      %v938 = vpack.c.bf16 %v882, %v878
      %v939 = vpack.c.bf16 %v887, %v883
      %v940 = vpack.c.bf16 %v888, %v884
      %v941 = vpack.c.bf16 %v889, %v885
      %v942 = vpack.c.bf16 %v890, %v886
      %v943 = vpack.c.bf16 %v895, %v891
      %v944 = vpack.c.bf16 %v896, %v892
      %v945 = vpack.c.bf16 %v897, %v893
      %v946 = vpack.c.bf16 %v898, %v894
      %v947 = vpack.c.bf16 %v903, %v899
      %v948 = vpack.c.bf16 %v904, %v900
      %v949 = vpack.c.bf16 %v905, %v901
      %v950 = vpack.c.bf16 %v906, %v902
      %v951 = vpack.c.bf16 %v911, %v907
      %v952 = vpack.c.bf16 %v912, %v908
      %v953 = vpack.c.bf16 %v913, %v909
      %v954 = vpack.c.bf16 %v914, %v910
      %v955 = vpack.c.bf16 %v919, %v915
      %v956 = vpack.c.bf16 %v920, %v916
      %v957 = vpack.c.bf16 %v921, %v917
      %v958 = vpack.c.bf16 %v922, %v918
      %v959 = vpack.c.bf16 %v927, %v923
      %v960 = vpack.c.bf16 %v928, %v924
      %v961 = vpack.c.bf16 %v929, %v925
      %v962 = vpack.c.bf16 %v930, %v926
      %v963 = vld [vmem:[%s4] sm:$0xf]
      %v964 = vld [vmem:[%s4 + $0x4] sm:$0xf]
      %v965 = vld [vmem:[%s4 + $0x8] sm:$0xf]
      %v966 = vld [vmem:[%s4 + $0xc] sm:$0xf]
      %v967 = vld [vmem:[%s4 + $0x10] sm:$0xf]
      %v968 = vld [vmem:[%s4 + $0x14] sm:$0xf]
      %v969 = vld [vmem:[%s4 + $0x18] sm:$0xf]
      %v970 = vld [vmem:[%s4 + $0x1c] sm:$0xf]
      %v971 = vld [vmem:[%s4 + $0x20] sm:$0xf]
      %v972 = vld [vmem:[%s4 + $0x24] sm:$0xf]
      %v973 = vld [vmem:[%s4 + $0x28] sm:$0xf]
      %v974 = vld [vmem:[%s4 + $0x2c] sm:$0xf]
      %v975 = vld [vmem:[%s4 + $0x30] sm:$0xf]
      %v976 = vld [vmem:[%s4 + $0x34] sm:$0xf]
      %v977 = vld [vmem:[%s4 + $0x38] sm:$0xf]
      %v978 = vld [vmem:[%s4 + $0x3c] sm:$0xf]
      %v979 = vld [vmem:[%s4 + $0x40] sm:$0xf]
      %v980 = vld [vmem:[%s4 + $0x44] sm:$0xf]
      %v981 = vld [vmem:[%s4 + $0x48] sm:$0xf]
      %v982 = vld [vmem:[%s4 + $0x4c] sm:$0xf]
      %v983 = vld [vmem:[%s4 + $0x50] sm:$0xf]
      %v984 = vld [vmem:[%s4 + $0x54] sm:$0xf]
      %v985 = vld [vmem:[%s4 + $0x58] sm:$0xf]
      %v986 = vld [vmem:[%s4 + $0x5c] sm:$0xf]
      %v987 = vld [vmem:[%s4 + $0x60] sm:$0xf]
      %v988 = vld [vmem:[%s4 + $0x64] sm:$0xf]
      %v989 = vld [vmem:[%s4 + $0x68] sm:$0xf]
      %v990 = vld [vmem:[%s4 + $0x6c] sm:$0xf]
      %v991 = vld [vmem:[%s4 + $0x70] sm:$0xf]
      %v992 = vld [vmem:[%s4 + $0x74] sm:$0xf]
      %v993 = vld [vmem:[%s4 + $0x78] sm:$0xf]
      %v994 = vld [vmem:[%s4 + $0x7c] sm:$0xf]
      %v995 = vld [vmem:[%s4 + $0x80] sm:$0xf]
      %v996 = vld [vmem:[%s4 + $0x84] sm:$0xf]
      %v997 = vld [vmem:[%s4 + $0x88] sm:$0xf]
      %v998 = vld [vmem:[%s4 + $0x8c] sm:$0xf]
      %v999 = vld [vmem:[%s4 + $0x90] sm:$0xf]
      %v1000 = vld [vmem:[%s4 + $0x94] sm:$0xf]
      %v1001 = vld [vmem:[%s4 + $0x98] sm:$0xf]
      %v1002 = vld [vmem:[%s4 + $0x9c] sm:$0xf]
      %v1003 = vld [vmem:[%s4 + $0xa0] sm:$0xf]
      %v1004 = vld [vmem:[%s4 + $0xa4] sm:$0xf]
      %v1005 = vld [vmem:[%s4 + $0xa8] sm:$0xf]
      %v1006 = vld [vmem:[%s4 + $0xac] sm:$0xf]
      %v1007 = vld [vmem:[%s4 + $0xb0] sm:$0xf]
      %v1008 = vld [vmem:[%s4 + $0xb4] sm:$0xf]
      %v1009 = vld [vmem:[%s4 + $0xb8] sm:$0xf]
      %v1010 = vld [vmem:[%s4 + $0xbc] sm:$0xf]
      %v1011 = vld [vmem:[%s4 + $0xc0] sm:$0xf]
      %v1012 = vld [vmem:[%s4 + $0xc4] sm:$0xf]
      %v1013 = vld [vmem:[%s4 + $0xc8] sm:$0xf]
      %v1014 = vld [vmem:[%s4 + $0xcc] sm:$0xf]
      %v1015 = vld [vmem:[%s4 + $0xd0] sm:$0xf]
      %v1016 = vld [vmem:[%s4 + $0xd4] sm:$0xf]
      %v1017 = vld [vmem:[%s4 + $0xd8] sm:$0xf]
      %v1018 = vld [vmem:[%s4 + $0xdc] sm:$0xf]
      %v1019 = vld [vmem:[%s4 + $0xe0] sm:$0xf]
      %v1020 = vld [vmem:[%s4 + $0xe4] sm:$0xf]
      %v1021 = vld [vmem:[%s4 + $0xe8] sm:$0xf]
      %v1022 = vld [vmem:[%s4 + $0xec] sm:$0xf]
      %v1023 = vld [vmem:[%s4 + $0xf0] sm:$0xf]
      %v1024 = vld [vmem:[%s4 + $0xf4] sm:$0xf]
      %v1025 = vld [vmem:[%s4 + $0xf8] sm:$0xf]
      %v1026 = vld [vmem:[%s4 + $0xfc] sm:$0xf]
      %v1027 = vld [vmem:[%s5] sm:$0x1]
      %v1029 = vperm.slane %v1027, 0
      %v1095 = vunpack.c.l.b16 %v963
      %v1096 = vunpack.c.l.b16 %v964
      %v1097 = vunpack.c.l.b16 %v965
      %v1098 = vunpack.c.l.b16 %v966
      %v1099 = vunpack.c.l.b16 %v967
      %v1100 = vunpack.c.l.b16 %v968
      %v1101 = vunpack.c.l.b16 %v969
      %v1102 = vunpack.c.l.b16 %v970
      %v1103 = vunpack.c.l.b16 %v971
      %v1104 = vunpack.c.l.b16 %v972
      %v1105 = vunpack.c.l.b16 %v973
      %v1106 = vunpack.c.l.b16 %v974
      %v1107 = vunpack.c.l.b16 %v975
      %v1108 = vunpack.c.l.b16 %v976
      %v1109 = vunpack.c.l.b16 %v977
      %v1110 = vunpack.c.l.b16 %v978
      %v1111 = vunpack.c.l.b16 %v979
      %v1112 = vunpack.c.l.b16 %v980
      %v1113 = vunpack.c.l.b16 %v981
      %v1114 = vunpack.c.l.b16 %v982
      %v1115 = vunpack.c.l.b16 %v983
      %v1116 = vunpack.c.l.b16 %v984
      %v1117 = vunpack.c.l.b16 %v985
      %v1118 = vunpack.c.l.b16 %v986
      %v1119 = vunpack.c.l.b16 %v987
      %v1120 = vunpack.c.l.b16 %v988
      %v1121 = vunpack.c.l.b16 %v989
      %v1122 = vunpack.c.l.b16 %v990
      %v1123 = vunpack.c.l.b16 %v991
      %v1124 = vunpack.c.l.b16 %v992
      %v1125 = vunpack.c.l.b16 %v993
      %v1126 = vunpack.c.l.b16 %v994
      %v1127 = vunpack.c.l.b16 %v995
      %v1128 = vunpack.c.l.b16 %v996
      %v1129 = vunpack.c.l.b16 %v997
      %v1130 = vunpack.c.l.b16 %v998
      %v1131 = vunpack.c.l.b16 %v999
      %v1132 = vunpack.c.l.b16 %v1000
      %v1133 = vunpack.c.l.b16 %v1001
      %v1134 = vunpack.c.l.b16 %v1002
      %v1135 = vunpack.c.l.b16 %v1003
      %v1136 = vunpack.c.l.b16 %v1004
      %v1137 = vunpack.c.l.b16 %v1005
      %v1138 = vunpack.c.l.b16 %v1006
      %v1139 = vunpack.c.l.b16 %v1007
      %v1140 = vunpack.c.l.b16 %v1008
      %v1141 = vunpack.c.l.b16 %v1009
      %v1142 = vunpack.c.l.b16 %v1010
      %v1143 = vunpack.c.l.b16 %v1011
      %v1144 = vunpack.c.l.b16 %v1012
      %v1145 = vunpack.c.l.b16 %v1013
      %v1146 = vunpack.c.l.b16 %v1014
      %v1147 = vunpack.c.l.b16 %v1015
      %v1148 = vunpack.c.l.b16 %v1016
      %v1149 = vunpack.c.l.b16 %v1017
      %v1150 = vunpack.c.l.b16 %v1018
      %v1151 = vunpack.c.l.b16 %v1019
      %v1152 = vunpack.c.l.b16 %v1020
      %v1153 = vunpack.c.l.b16 %v1021
      %v1154 = vunpack.c.l.b16 %v1022
      %v1155 = vunpack.c.l.b16 %v1023
      %v1156 = vunpack.c.l.b16 %v1024
      %v1157 = vunpack.c.l.b16 %v1025
      %v1158 = vunpack.c.l.b16 %v1026
      %v1159 = vpack.c.b16 %v1096, %v1095
      %v1160 = vpack.c.b16 %v1098, %v1097
      %v1161 = vpack.c.b16 %v1100, %v1099
      %v1162 = vpack.c.b16 %v1102, %v1101
      %v1163 = vpack.c.b16 %v1104, %v1103
      %v1164 = vpack.c.b16 %v1106, %v1105
      %v1165 = vpack.c.b16 %v1108, %v1107
      %v1166 = vpack.c.b16 %v1110, %v1109
      %v1167 = vpack.c.b16 %v1112, %v1111
      %v1168 = vpack.c.b16 %v1114, %v1113
      %v1169 = vpack.c.b16 %v1116, %v1115
      %v1170 = vpack.c.b16 %v1118, %v1117
      %v1171 = vpack.c.b16 %v1120, %v1119
      %v1172 = vpack.c.b16 %v1122, %v1121
      %v1173 = vpack.c.b16 %v1124, %v1123
      %v1174 = vpack.c.b16 %v1126, %v1125
      %v1175 = vpack.c.b16 %v1128, %v1127
      %v1176 = vpack.c.b16 %v1130, %v1129
      %v1177 = vpack.c.b16 %v1132, %v1131
      %v1178 = vpack.c.b16 %v1134, %v1133
      %v1179 = vpack.c.b16 %v1136, %v1135
      %v1180 = vpack.c.b16 %v1138, %v1137
      %v1181 = vpack.c.b16 %v1140, %v1139
      %v1182 = vpack.c.b16 %v1142, %v1141
      %v1183 = vpack.c.b16 %v1144, %v1143
      %v1184 = vpack.c.b16 %v1146, %v1145
      %v1185 = vpack.c.b16 %v1148, %v1147
      %v1186 = vpack.c.b16 %v1150, %v1149
      %v1187 = vpack.c.b16 %v1152, %v1151
      %v1188 = vpack.c.b16 %v1154, %v1153
      %v1189 = vpack.c.b16 %v1156, %v1155
      %v1190 = vpack.c.b16 %v1158, %v1157
      %1223 = vmatpush.bf16.msra.mxu0 %v1166
      %1224 = vmatpush.bf16.msra.mxu0 %v1165
      %1225 = vmatpush.bf16.msra.mxu0 %v1164
      %1226 = vmatpush.bf16.msra.mxu0 %v1163
      %1227 = vmatpush.bf16.msra.mxu0 %v1162
      %1228 = vmatpush.bf16.msra.mxu0 %v1161
      %1229 = vmatpush.bf16.msra.mxu0 %v1160
      %1230 = vmatpush.bf16.msra.mxu0 %v1159
      %1231 = vmatmul.bf16.gmra.mxu0 %v931
      %v1232 = vpop.f32.mrf.mxu0
      %v1233 = vadd.f32 %v1029, %v1232
      %v1234 = vpop.f32.mrf.mxu0
      %v1235 = vadd.f32 %v1029, %v1234
      %1236 = vmatmul.bf16.gmra.mxu0 %v935
      %v1237 = vpop.f32.mrf.mxu0
      %v1238 = vadd.f32 %v1029, %v1237
      %v1239 = vpop.f32.mrf.mxu0
      %v1240 = vadd.f32 %v1029, %v1239
      %1241 = vmatmul.bf16.gmra.mxu0 %v939
      %v1242 = vpop.f32.mrf.mxu0
      %v1243 = vadd.f32 %v1029, %v1242
      %v1244 = vpop.f32.mrf.mxu0
      %v1245 = vadd.f32 %v1029, %v1244
      %1246 = vmatmul.bf16.gmra.mxu0 %v943
      %v1247 = vpop.f32.mrf.mxu0
      %v1248 = vadd.f32 %v1029, %v1247
      %v1249 = vpop.f32.mrf.mxu0
      %v1250 = vadd.f32 %v1029, %v1249
      %1251 = vmatmul.bf16.gmra.mxu0 %v947
      %v1252 = vpop.f32.mrf.mxu0
      %v1253 = vadd.f32 %v1029, %v1252
      %v1254 = vpop.f32.mrf.mxu0
      %v1255 = vadd.f32 %v1029, %v1254
      %1256 = vmatmul.bf16.gmra.mxu0 %v951
      %v1257 = vpop.f32.mrf.mxu0
      %v1258 = vadd.f32 %v1029, %v1257
      %v1259 = vpop.f32.mrf.mxu0
      %v1260 = vadd.f32 %v1029, %v1259
      %1261 = vmatmul.bf16.gmra.mxu0 %v955
      %v1262 = vpop.f32.mrf.mxu0
      %v1263 = vadd.f32 %v1029, %v1262
      %v1264 = vpop.f32.mrf.mxu0
      %v1265 = vadd.f32 %v1029, %v1264
      %1266 = vmatmul.bf16.gmra.mxu0 %v959
      %v1267 = vpop.f32.mrf.mxu0
      %v1268 = vadd.f32 %v1029, %v1267
      %v1269 = vpop.f32.mrf.mxu0
      %v1270 = vadd.f32 %v1029, %v1269
      %1271 = vdwg.mxu0
      %1272 = vmatpush.bf16.msra.mxu0 %v1174
      %1273 = vmatpush.bf16.msra.mxu0 %v1173
      %1274 = vmatpush.bf16.msra.mxu0 %v1172
      %1275 = vmatpush.bf16.msra.mxu0 %v1171
      %1276 = vmatpush.bf16.msra.mxu0 %v1170
      %1277 = vmatpush.bf16.msra.mxu0 %v1169
      %1278 = vmatpush.bf16.msra.mxu0 %v1168
      %1279 = vmatpush.bf16.msra.mxu0 %v1167
      %1280 = vmatmul.bf16.gmra.mxu0 %v932
      %v1281 = vpop.f32.mrf.mxu0
      %v1282 = vadd.f32 %v1233, %v1281
      %v1283 = vpop.f32.mrf.mxu0
      %v1284 = vadd.f32 %v1235, %v1283
      %1285 = vmatmul.bf16.gmra.mxu0 %v936
      %v1286 = vpop.f32.mrf.mxu0
      %v1287 = vadd.f32 %v1238, %v1286
      %v1288 = vpop.f32.mrf.mxu0
      %v1289 = vadd.f32 %v1240, %v1288
      %1290 = vmatmul.bf16.gmra.mxu0 %v940
      %v1291 = vpop.f32.mrf.mxu0
      %v1292 = vadd.f32 %v1243, %v1291
      %v1293 = vpop.f32.mrf.mxu0
      %v1294 = vadd.f32 %v1245, %v1293
      %1295 = vmatmul.bf16.gmra.mxu0 %v944
      %v1296 = vpop.f32.mrf.mxu0
      %v1297 = vadd.f32 %v1248, %v1296
      %v1298 = vpop.f32.mrf.mxu0
      %v1299 = vadd.f32 %v1250, %v1298
      %1300 = vmatmul.bf16.gmra.mxu0 %v948
      %v1301 = vpop.f32.mrf.mxu0
      %v1302 = vadd.f32 %v1253, %v1301
      %v1303 = vpop.f32.mrf.mxu0
      %v1304 = vadd.f32 %v1255, %v1303
      %1305 = vmatmul.bf16.gmra.mxu0 %v952
      %v1306 = vpop.f32.mrf.mxu0
      %v1307 = vadd.f32 %v1258, %v1306
      %v1308 = vpop.f32.mrf.mxu0
      %v1309 = vadd.f32 %v1260, %v1308
      %1310 = vmatmul.bf16.gmra.mxu0 %v956
      %v1311 = vpop.f32.mrf.mxu0
      %v1312 = vadd.f32 %v1263, %v1311
      %v1313 = vpop.f32.mrf.mxu0
      %v1314 = vadd.f32 %v1265, %v1313
      %1315 = vmatmul.bf16.gmra.mxu0 %v960
      %v1316 = vpop.f32.mrf.mxu0
      %v1317 = vadd.f32 %v1268, %v1316
      %v1318 = vpop.f32.mrf.mxu0
      %v1319 = vadd.f32 %v1270, %v1318
      %1320 = vdwg.mxu0
      %1321 = vmatpush.bf16.msra.mxu0 %v1182
      %1322 = vmatpush.bf16.msra.mxu0 %v1181
      %1323 = vmatpush.bf16.msra.mxu0 %v1180
      %1324 = vmatpush.bf16.msra.mxu0 %v1179
      %1325 = vmatpush.bf16.msra.mxu0 %v1178
      %1326 = vmatpush.bf16.msra.mxu0 %v1177
      %1327 = vmatpush.bf16.msra.mxu0 %v1176
      %1328 = vmatpush.bf16.msra.mxu0 %v1175
      %1329 = vmatmul.bf16.gmra.mxu0 %v933
      %v1330 = vpop.f32.mrf.mxu0
      %v1331 = vadd.f32 %v1282, %v1330
      %v1332 = vpop.f32.mrf.mxu0
      %v1333 = vadd.f32 %v1284, %v1332
      %1334 = vmatmul.bf16.gmra.mxu0 %v937
      %v1335 = vpop.f32.mrf.mxu0
      %v1336 = vadd.f32 %v1287, %v1335
      %v1337 = vpop.f32.mrf.mxu0
      %v1338 = vadd.f32 %v1289, %v1337
      %1339 = vmatmul.bf16.gmra.mxu0 %v941
      %v1340 = vpop.f32.mrf.mxu0
      %v1341 = vadd.f32 %v1292, %v1340
      %v1342 = vpop.f32.mrf.mxu0
      %v1343 = vadd.f32 %v1294, %v1342
      %1344 = vmatmul.bf16.gmra.mxu0 %v945
      %v1345 = vpop.f32.mrf.mxu0
      %v1346 = vadd.f32 %v1297, %v1345
      %v1347 = vpop.f32.mrf.mxu0
      %v1348 = vadd.f32 %v1299, %v1347
      %1349 = vmatmul.bf16.gmra.mxu0 %v949
      %v1350 = vpop.f32.mrf.mxu0
      %v1351 = vadd.f32 %v1302, %v1350
      %v1352 = vpop.f32.mrf.mxu0
      %v1353 = vadd.f32 %v1304, %v1352
      %1354 = vmatmul.bf16.gmra.mxu0 %v953
      %v1355 = vpop.f32.mrf.mxu0
      %v1356 = vadd.f32 %v1307, %v1355
      %v1357 = vpop.f32.mrf.mxu0
      %v1358 = vadd.f32 %v1309, %v1357
      %1359 = vmatmul.bf16.gmra.mxu0 %v957
      %v1360 = vpop.f32.mrf.mxu0
      %v1361 = vadd.f32 %v1312, %v1360
      %v1362 = vpop.f32.mrf.mxu0
      %v1363 = vadd.f32 %v1314, %v1362
      %1364 = vmatmul.bf16.gmra.mxu0 %v961
      %v1365 = vpop.f32.mrf.mxu0
      %v1366 = vadd.f32 %v1317, %v1365
      %v1367 = vpop.f32.mrf.mxu0
      %v1368 = vadd.f32 %v1319, %v1367
      %1369 = vdwg.mxu0
      %1370 = vmatpush.bf16.msra.mxu0 %v1190
      %1371 = vmatpush.bf16.msra.mxu0 %v1189
      %1372 = vmatpush.bf16.msra.mxu0 %v1188
      %1373 = vmatpush.bf16.msra.mxu0 %v1187
      %1374 = vmatpush.bf16.msra.mxu0 %v1186
      %1375 = vmatpush.bf16.msra.mxu0 %v1185
      %1376 = vmatpush.bf16.msra.mxu0 %v1184
      %1377 = vmatpush.bf16.msra.mxu0 %v1183
      %1378 = vmatmul.bf16.gmra.mxu0 %v934
      %v1379 = vpop.f32.mrf.mxu0
      %v1380 = vadd.f32 %v1331, %v1379
      %v1381 = vpop.f32.mrf.mxu0
      %v1382 = vadd.f32 %v1333, %v1381
      %1383 = vmatmul.bf16.gmra.mxu0 %v938
      %v1384 = vpop.f32.mrf.mxu0
      %v1385 = vadd.f32 %v1336, %v1384
      %v1386 = vpop.f32.mrf.mxu0
      %v1387 = vadd.f32 %v1338, %v1386
      %1388 = vmatmul.bf16.gmra.mxu0 %v942
      %v1389 = vpop.f32.mrf.mxu0
      %v1390 = vadd.f32 %v1341, %v1389
      %v1391 = vpop.f32.mrf.mxu0
      %v1392 = vadd.f32 %v1343, %v1391
      %1393 = vmatmul.bf16.gmra.mxu0 %v946
      %v1394 = vpop.f32.mrf.mxu0
      %v1395 = vadd.f32 %v1346, %v1394
      %v1396 = vpop.f32.mrf.mxu0
      %v1397 = vadd.f32 %v1348, %v1396
      %1398 = vmatmul.bf16.gmra.mxu0 %v950
      %v1399 = vpop.f32.mrf.mxu0
      %v1400 = vadd.f32 %v1351, %v1399
      %v1401 = vpop.f32.mrf.mxu0
      %v1402 = vadd.f32 %v1353, %v1401
      %1403 = vmatmul.bf16.gmra.mxu0 %v954
      %v1404 = vpop.f32.mrf.mxu0
      %v1405 = vadd.f32 %v1356, %v1404
      %v1406 = vpop.f32.mrf.mxu0
      %v1407 = vadd.f32 %v1358, %v1406
      %1408 = vmatmul.bf16.gmra.mxu0 %v958
      %v1409 = vpop.f32.mrf.mxu0
      %v1410 = vadd.f32 %v1361, %v1409
      %v1411 = vpop.f32.mrf.mxu0
      %v1412 = vadd.f32 %v1363, %v1411
      %1413 = vmatmul.bf16.gmra.mxu0 %v962
      %v1414 = vpop.f32.mrf.mxu0
      %v1415 = vadd.f32 %v1366, %v1414
      %v1416 = vpop.f32.mrf.mxu0
      %v1417 = vadd.f32 %v1368, %v1416
      %1418 = vdwg.mxu0
      %v1419 = vtanh.pop %v1380
      %v1420 = vtanh.pop %v1382
      %v1421 = vtanh.pop %v1385
      %v1422 = vtanh.pop %v1387
      %v1423 = vtanh.pop %v1390
      %v1424 = vtanh.pop %v1392
      %v1425 = vtanh.pop %v1395
      %v1426 = vtanh.pop %v1397
      %v1427 = vtanh.pop %v1400
      %v1428 = vtanh.pop %v1402
      %v1429 = vtanh.pop %v1405
      %v1430 = vtanh.pop %v1407
      %v1431 = vtanh.pop %v1410
      %v1432 = vtanh.pop %v1412
      %v1433 = vtanh.pop %v1415
      %v1434 = vtanh.pop %v1417
      %v1435 = vpack.c.bf16 %v1420, %v1419
      %v1436 = vpack.c.bf16 %v1422, %v1421
      %v1437 = vpack.c.bf16 %v1424, %v1423
      %v1438 = vpack.c.bf16 %v1426, %v1425
      %v1439 = vpack.c.bf16 %v1428, %v1427
      %v1440 = vpack.c.bf16 %v1430, %v1429
      %v1441 = vpack.c.bf16 %v1432, %v1431
      %v1442 = vpack.c.bf16 %v1434, %v1433
      %v1443 = vld [vmem:[%s6] sm:$0x1]
      %s1444 = sld [smem:[#allocation7]]
      %v1445 = vstv %s1444
      %1446 = vmatpush.bf16.xpose.msra.mxu0 %v1442
      %1447 = vmatpush.bf16.xpose.msra.mxu0 %v1441
      %1448 = vmatpush.bf16.xpose.msra.mxu0 %v1440
      %1449 = vmatpush.bf16.xpose.msra.mxu0 %v1439
      %1450 = vmatpush.bf16.xpose.msra.mxu0 %v1438
      %1451 = vmatpush.bf16.xpose.msra.mxu0 %v1437
      %1452 = vmatpush.bf16.xpose.msra.mxu0 %v1436
      %1453 = vmatpush.bf16.xpose.msra.mxu0 %v1435
      %1454 = vmatmul.bf16.gmra.mxu0 %v1443
      %v1455 = vpop.f32.mrf.mxu0
      %v1456 = vadd.f32 %v1445, %v1455
      %v1457 = vpop.f32.mrf.mxu0
      %1458 = vdwg.mxu0
      %s1459 = smul.u32 %s28, 2
      %s1460 = sadd.s32 %s1459, %s29
      %s1461 = smul.u32 %s1460, 128
      %v1462 = vlaneseq
      %v1463 = vand.u32 %v1462, 127
      %v1464 = vstv %s1461
      %v1465 = vadd.s32 %v1464, %v1463
      %s1466 = sld [smem:[#allocation6]]
      %v1467 = vstv %s1466
      %vm1468 = vcmp.lt.s32.totalorder %v1465, %v1467
      %v1469 = vsel %vm1468, %v1456, -1e+30
      %1470 = vst [vmem:[%s380] sm:$0x1] %v1469
      %v1471 = vld [vmem:[#allocation2] sm:$0x1]
      %vm1472 = vcmask 1040384
      %v1473 = vsel %vm1472, %v1469, -inf
      %1474 = vmax.xlane.f32.xlu0 %v1473
      %v1475 = vpop.xlane.xlu0 %1474
      %v1476 = vmax.f32 %v1471, %v1475
      %v1477 = vsub.f32 %v1471, %v1476
      %v1478 = vmul.f32 %v1477, 1.442695
      %v1479 = vpow.pop %v1478
      %1481 = vset.pattern.permute.xlu0 0
      %1482 = vperm.xlu0 %1481, %v1476
      %v1483 = vpop.permute.xlu0 %1482
      %v1485 = vperm.slane %v1483, 0
      %v1486 = vsub.f32 %v1469, %v1485
      %v1487 = vmul.f32 %v1486, 1.442695
      %v1488 = vpow.pop %v1487
      %v1489 = vld [vmem:[#allocation3] sm:$0x1]
      %v1490 = vmul.f32 %v1479, %v1489
      %v1491 = vsel %vm1472, %v1488, 0.0
      %1492 = vadd.xlane.f32.xlu0 %v1491
      %v1493 = vpop.xlane.xlu0 %1492
      %v1494 = vadd.f32 %v1490, %v1493
      %vm1495 = vcmask 0
      %1496 = vst.msk [vmem:[#allocation3] sm:$0x1] %vm1495, %v1494
      %v1497 = vld [vmem:[#allocation4] sm:$0xf]
      %1499 = vset.pattern.permute.xlu0 0
      %1500 = vperm.xlu0 %1499, %v1479
      %v1501 = vpop.permute.xlu0 %1500
      %v1503 = vperm.slane %v1501, 0
      %v1504 = vmul.f32 %v1503, %v1497
      %v1505 = vpack.c.bf16 %v1488, %v1488
      %1506 = vmatpush.bf16.msra.mxu0 %v959
      %1507 = vmatpush.bf16.msra.mxu0 %v955
      %1508 = vmatpush.bf16.msra.mxu0 %v951
      %1509 = vmatpush.bf16.msra.mxu0 %v947
      %1510 = vmatpush.bf16.msra.mxu0 %v943
      %1511 = vmatpush.bf16.msra.mxu0 %v939
      %1512 = vmatpush.bf16.msra.mxu0 %v935
      %1513 = vmatpush.bf16.msra.mxu0 %v931
      %1514 = vmatmul.bf16.gmra.mxu0 %v1505
      %v1515 = vpop.f32.mrf.mxu0
      %v1516 = vadd.f32 0.0, %v1515
      %v1517 = vpop.f32.mrf.mxu0
      %1518 = vdwg.mxu0
      %1519 = vmatpush.bf16.msra.mxu0 %v960
      %1520 = vmatpush.bf16.msra.mxu0 %v956
      %1521 = vmatpush.bf16.msra.mxu0 %v952
      %1522 = vmatpush.bf16.msra.mxu0 %v948
      %1523 = vmatpush.bf16.msra.mxu0 %v944
      %1524 = vmatpush.bf16.msra.mxu0 %v940
      %1525 = vmatpush.bf16.msra.mxu0 %v936
      %1526 = vmatpush.bf16.msra.mxu0 %v932
      %1527 = vmatmul.bf16.gmra.mxu0 %v1505
      %v1528 = vpop.f32.mrf.mxu0
      %v1529 = vadd.f32 0.0, %v1528
      %v1530 = vpop.f32.mrf.mxu0
      %1531 = vdwg.mxu0
      %1532 = vmatpush.bf16.msra.mxu0 %v961
      %1533 = vmatpush.bf16.msra.mxu0 %v957
      %1534 = vmatpush.bf16.msra.mxu0 %v953
      %1535 = vmatpush.bf16.msra.mxu0 %v949
      %1536 = vmatpush.bf16.msra.mxu0 %v945
      %1537 = vmatpush.bf16.msra.mxu0 %v941
      %1538 = vmatpush.bf16.msra.mxu0 %v937
      %1539 = vmatpush.bf16.msra.mxu0 %v933
      %1540 = vmatmul.bf16.gmra.mxu0 %v1505
      %v1541 = vpop.f32.mrf.mxu0
      %v1542 = vadd.f32 0.0, %v1541
      %v1543 = vpop.f32.mrf.mxu0
      %1544 = vdwg.mxu0
      %1545 = vmatpush.bf16.msra.mxu0 %v962
      %1546 = vmatpush.bf16.msra.mxu0 %v958
      %1547 = vmatpush.bf16.msra.mxu0 %v954
      %1548 = vmatpush.bf16.msra.mxu0 %v950
      %1549 = vmatpush.bf16.msra.mxu0 %v946
      %1550 = vmatpush.bf16.msra.mxu0 %v942
      %1551 = vmatpush.bf16.msra.mxu0 %v938
      %1552 = vmatpush.bf16.msra.mxu0 %v934
      %1553 = vmatmul.bf16.gmra.mxu0 %v1505
      %v1554 = vpop.f32.mrf.mxu0
      %v1555 = vadd.f32 0.0, %v1554
      %v1556 = vpop.f32.mrf.mxu0
      %1557 = vdwg.mxu0
      %v1562 = vrot.slane %v1529, 7
      %v1563 = vrot.slane %v1542, 6
      %v1564 = vrot.slane %v1555, 5
      %v1565 = vsel %vm1472, %v1516, %v1562
      %vm1566 = vcmask 1042434
      %v1567 = vsel %vm1566, %v1563, %v1564
      %vm1568 = vcmask 1041408
      %v1569 = vsel %vm1568, %v1565, %v1567
      %v1571 = vadd.f32 %v1504, %v1569
      %v1572 = vlaneseq
      %vm1573 = vcmp.ge.s32.totalorder %v1572, 0
      %vm1574 = vcmp.lt.s32.totalorder %v1572, 512
      %vm1575 = vmand %vm1573, %vm1574
      %1576 = vst.msk [vmem:[#allocation4] sm:$0xf] %vm1575, %v1571
      %1577 = vst.msk [vmem:[#allocation2] sm:$0x1] %vm1495, %v1476
      %p1578 = scmp.eq.s32.totalorder %s29, 1
      // Predicated region
      $region53: #{dattention_forward.1} parent=47 // pred_check
        %p1579 = pneg %p1578
      $region54: #{dattention_forward.1} parent=47 // pred_check_branch
        %1581 = sbr.rel (%p1579) target = $region56
      $region55: #{dattention_forward.1} parent=47 // pred_region
        %v1582 = vld [vmem:[#allocation2] sm:$0x1]
        %1584 = vset.pattern.permute.xlu0 0
        %1585 = vperm.xlu0 %1584, %v1582
        %v1586 = vpop.permute.xlu0 %1585
        %v1588 = vperm.slane %v1586, 0
        %vm1589 = vcmp.lt.s32.totalorder %v1572, 128
        %vm1590 = vmand %vm1573, %vm1589
        %1591 = vst.msk [vmem:[%s386] sm:$0x1] %vm1590, %v1588
        %v1592 = vld [vmem:[#allocation3] sm:$0x1]
        %1594 = vset.pattern.permute.xlu0 0
        %1595 = vperm.xlu0 %1594, %v1592
        %v1596 = vpop.permute.xlu0 %1595
        %v1598 = vperm.slane %v1596, 0
        %1599 = vst.msk [vmem:[%s386 + $0x1] sm:$0x1] %vm1590, %v1598
        %v1600 = vld [vmem:[#allocation4] sm:$0xf]
        %1601 = vst.msk [vmem:[%s391] sm:$0xf] %vm1575, %v1600
      $region56: #{dattention_forward.1} parent=47 // pred_fallthru
        _
      %s1602 = smul.u32 %s28, 2
      %s1603 = sadd.s32 %s1602, %s29
      %p1604 = scmp.lt.s32.totalorder %s1603, 3
      %s1605 = scalar_select %p1604, %s1603, 3
      %s1606 = scalar_lea.vmem %s8, %s1605
      %s1607 = smul.u32 2, %s28
      %p1608 = scmp.lt.s32.totalorder %s1607, 3
      %s1609 = scalar_select %p1608, %s1607, 3
      %s1610 = scalar_lea.vmem %s9, %s1609
      %s1611 = smul.u32 4, %s28
      %p1612 = scmp.lt.s32.totalorder %s1611, 7
      %s1613 = scalar_select %p1612, %s1611, 7
      %s1614 = scalar_lea.vmem %s10, %s1613
      // Predicated region
      $region57: #{dattention_forward.1} parent=47 // pred_check
        %p1615 = pneg %p214
      $region58: #{dattention_forward.1} parent=47 // pred_check_branch
        %1617 = sbr.rel (%p1615) target = $region60
      $region59: #{dattention_forward.1} parent=47 // pred_region
        %s1618 = smul.u32 %s28, 2
        %s1619 = sadd.s32 %s1618, %s29
      $region60: #{dattention_forward.1} parent=47 // pred_fallthru
        _
      // Predicated region
      $region61: #{dattention_forward.1} parent=47 // pred_check
        %p1620 = pneg %p240
      $region62: #{dattention_forward.1} parent=47 // pred_check_branch
        %1622 = sbr.rel (%p1620) target = $region64
      $region63: #{dattention_forward.1} parent=47 // pred_region
        %s1623 = smul.u32 2, %s28
      $region64: #{dattention_forward.1} parent=47 // pred_fallthru
        _
      // Predicated region
      $region65: #{dattention_forward.1} parent=47 // pred_check
        %p1624 = pneg %p266
      $region66: #{dattention_forward.1} parent=47 // pred_check_branch
        %1626 = sbr.rel (%p1624) target = $region68
      $region67: #{dattention_forward.1} parent=47 // pred_region
        %s1627 = smul.u32 4, %s28
      $region68: #{dattention_forward.1} parent=47 // pred_fallthru
        _
    $region48: #{dattention_forward.1} parent=5 // pred_fallthru
      _
    %p1628 = scmp.le.s32.totalorder 2, %s19
    // Predicated region
    $region69: #{dattention_forward.1} parent=5 // pred_check
      %p1629 = pneg %p1628
    $region70: #{dattention_forward.1} parent=5 // pred_check_branch
      %1631 = sbr.rel (%p1629) target = $region72
    $region71: #{dattention_forward.1} parent=5 // pred_region
      %s1632 = ssub.s32 %s19, 2
      // Predicated region
      $region73: #{dattention_forward.1} parent=71 // pred_check
        %p1633 = pneg %p220
      $region74: #{dattention_forward.1} parent=71 // pred_check_branch
        %1635 = sbr.rel (%p1633) target = $region76
      $region75: #{dattention_forward.1} parent=71 // pred_region
        %s1636 = smul.u32 %s30, 2
        %s1637 = sadd.s32 %s1636, %s31
        %p1638 = scmp.lt.s32.totalorder %s1637, 3
        %s1639 = scalar_select %p1638, %s1637, 3
        %s1640 = scalar_lea.vmem %s8, %s1639
      $region76: #{dattention_forward.1} parent=71 // pred_fallthru
        _
      // Predicated region
      $region77: #{dattention_forward.1} parent=71 // pred_check
        %p1641 = pneg %p246
      $region78: #{dattention_forward.1} parent=71 // pred_check_branch
        %1643 = sbr.rel (%p1641) target = $region80
      $region79: #{dattention_forward.1} parent=71 // pred_region
        %s1644 = smul.u32 2, %s30
        %p1645 = scmp.lt.s32.totalorder %s1644, 3
        %s1646 = scalar_select %p1645, %s1644, 3
        %s1647 = scalar_lea.vmem %s9, %s1646
      $region80: #{dattention_forward.1} parent=71 // pred_fallthru
        _
      // Predicated region
      $region81: #{dattention_forward.1} parent=71 // pred_check
        %p1648 = pneg %p272
      $region82: #{dattention_forward.1} parent=71 // pred_check_branch
        %1650 = sbr.rel (%p1648) target = $region84
      $region83: #{dattention_forward.1} parent=71 // pred_region
        %s1651 = smul.u32 4, %s30
        %p1652 = scmp.lt.s32.totalorder %s1651, 7
        %s1653 = scalar_select %p1652, %s1651, 7
        %s1654 = scalar_lea.vmem %s10, %s1653
      $region84: #{dattention_forward.1} parent=71 // pred_fallthru
        _
    $region72: #{dattention_forward.1} parent=5 // pred_fallthru
      _
  $region6: #{dattention_forward.1} parent=0 // loop_footer
    %s23 = sadd.s32 1, %s19
  $region7: #{dattention_forward.1} parent=0 // loop_footer_branch
    %18 = sbr.rel target = $region3
  $region8: #{dattention_forward.1} parent=0 // loop_exit
    _

</llo_original>
